<compile_context>
chip_gen: v7x
topology: tpu7x:2x2x1
jax: 0.10.0
libtpu: 0.0.40
codegen_flags: <defaults>
</compile_context>

<pallas_src>
import functools

import jax
import jax.numpy as jnp
from jax import lax
from jax.experimental import pallas as pl
from jax.experimental.pallas import tpu as pltpu

_EPS = 1e-5                      # BatchNorm3d default eps
_VMEM_LIMIT = 48 * 1024 * 1024   # explicit scoped-VMEM budget (< v7x 64 MiB)


# --------------------------------------------------------------------------
# Pass 1: Gram / sum statistics of the raw inputs g and x.
# --------------------------------------------------------------------------
def _stats_gx_kernel(g_ref, x_ref, gram_g_ref, sum_g_ref, gram_x_ref, sum_x_ref):
    first = jnp.logical_and(pl.program_id(0) == 0, pl.program_id(1) == 0)

    @pl.when(first)
    def _():
        gram_g_ref[...] = jnp.zeros_like(gram_g_ref)
        sum_g_ref[...] = jnp.zeros_like(sum_g_ref)
        gram_x_ref[...] = jnp.zeros_like(gram_x_ref)
        sum_x_ref[...] = jnp.zeros_like(sum_x_ref)

    g = g_ref[...]   # (Cl, T), lane-dense
    x = x_ref[...]   # (Cg, T)
    nt = (((1,), (1,)), ((), ()))  # contract the lane (M) axis of both operands
    gram_g_ref[...] += lax.dot_general(g, g, nt, preferred_element_type=jnp.float32)
    gram_x_ref[...] += lax.dot_general(x, x, nt, preferred_element_type=jnp.float32)
    sum_g_ref[...] += jnp.sum(g, axis=1, keepdims=True)
    sum_x_ref[...] += jnp.sum(x, axis=1, keepdims=True)


# --------------------------------------------------------------------------
# Pass 2: p = wp^T relu(BN(Wg g) + BN(Wx x)) per tile + psi-BN statistics.
# --------------------------------------------------------------------------
def _psi_stats_kernel(g_ref, x_ref, wgT_ref, wxT_ref, sg_ref, hg_ref,
                      sx_ref, hx_ref, wp_ref, p_ref, sum_p_ref, ssq_p_ref):
    first = jnp.logical_and(pl.program_id(0) == 0, pl.program_id(1) == 0)

    @pl.when(first)
    def _():
        sum_p_ref[...] = jnp.zeros_like(sum_p_ref)
        ssq_p_ref[...] = jnp.zeros_like(ssq_p_ref)

    g = g_ref[...]                                                 # (Cl, T)
    x = x_ref[...]                                                 # (Cg, T)
    # 1x1x1 convs as (F_int, C) x (C, T) matmuls; BN folded to scale/shift.
    g1 = jnp.dot(wgT_ref[...], g, preferred_element_type=jnp.float32)
    x1 = jnp.dot(wxT_ref[...], x, preferred_element_type=jnp.float32)
    s = jnp.maximum(g1 * sg_ref[...] + hg_ref[...]
                    + x1 * sx_ref[...] + hx_ref[...], 0.0)         # (F_int, T)
    # psi conv (single output channel): sublane-reduce MAC, lane-dense result.
    p = jnp.sum(s * wp_ref[...], axis=0, keepdims=True)            # (1, T)
    p_ref[...] = p
    sum_p_ref[...] += jnp.sum(p, axis=1, keepdims=True)
    ssq_p_ref[...] += jnp.sum(p * p, axis=1, keepdims=True)


# --------------------------------------------------------------------------
# Pass 3: out = x * sigmoid(scale_p * p + shift_p).  Fully parallel.
# --------------------------------------------------------------------------
def _gate_kernel(x_ref, p_ref, sp_ref, hp_ref, out_ref):
    psi = jax.nn.sigmoid(p_ref[...] * sp_ref[...] + hp_ref[...])   # (1, T)
    out_ref[...] = x_ref[...] * psi                                # (Cg, T)


# --------------------------------------------------------------------------
# Host-side helpers (tiny per-channel math between passes).
# --------------------------------------------------------------------------
def _fold_bn(gram, ssum, wT, gam, bet, m_tot):
    """Fold training-mode BN of y = wT @ inp (conv bias cancels) into a
    per-channel scale/shift: y_bn = y * scale + shift."""
    mean_in = ssum / m_tot                                  # (Cin, 1)
    e2 = gram / m_tot                                       # (Cin, Cin)
    mean_y = wT @ mean_in                                   # (Cout, 1)
    e_y2 = jnp.sum((wT @ e2) * wT, axis=1, keepdims=True)   # diag(wT E2 wT^T)
    var_y = jnp.maximum(e_y2 - mean_y * mean_y, 0.0)
    scale = gam * lax.rsqrt(var_y + _EPS)
    shift = bet - mean_y * scale
    return scale, shift


def _pick_tile(ms, cap):
    if ms % 128 != 0:
        # TODO(synk): ragged (non-128-multiple) spatial sizes need masked stats.
        raise ValueError("D*H*W must be a multiple of 128 for this kernel")
    cap = max(int(cap), 128)
    for cand in (2048, 1024, 512, 256, 128):
        if cand <= cap and ms % cand == 0:
            return cand
    return 128


def attention_block_pallas(g, x, params, *, tile_cap=2048):
    """g: (N, F_l, D, H, W), x: (N, F_g, D, H, W) float32 NCDHW -> NCDHW."""
    N, Cl, D, H, W = g.shape
    _, Cg, _, _, _ = x.shape
    Ms = D * H * W
    m_tot = N * Ms
    tile = _pick_tile(Ms, tile_cap)
    n_t = Ms // tile
    grid = (N, n_t)
    F_int = params["wg"].shape[1]
    f32 = jnp.float32

    # Channels-major 3-D views: pure reshapes, no transposes.
    g3 = g.reshape(N, Cl, Ms)
    x3 = x.reshape(N, Cg, Ms)

    # Kernel-layout parameters: weights as (Cout, Cin), per-channel vectors
    # as (C, 1) columns.  Conv biases are intentionally unused (BN training
    # mode cancels them).
    wgT = params["wg"].T.astype(f32)                         # (F_int, Cl)
    wxT = params["wx"].T.astype(f32)                         # (F_int, Cg)
    wp_col = params["wp"].astype(f32).reshape(F_int, 1)      # (F_int, 1)
    gam_g = params["gam_g"].astype(f32).reshape(F_int, 1)
    bet_g = params["bet_g"].astype(f32).reshape(F_int, 1)
    gam_x = params["gam_x"].astype(f32).reshape(F_int, 1)
    bet_x = params["bet_x"].astype(f32).reshape(F_int, 1)
    gam_p = params["gam_p"].astype(f32).reshape(1, 1)
    bet_p = params["bet_p"].astype(f32).reshape(1, 1)

    tile_spec_g = pl.BlockSpec((None, Cl, tile), lambda n, t: (n, 0, t))
    tile_spec_x = pl.BlockSpec((None, Cg, tile), lambda n, t: (n, 0, t))
    tile_spec_p = pl.BlockSpec((None, 1, tile), lambda n, t: (n, 0, t))

    def const2d(shape):
        # Resident across the whole grid: DMA'd once, never re-fetched.
        return pl.BlockSpec(shape, lambda n, t: (0, 0))

    reduce_params = pltpu.CompilerParams(
        dimension_semantics=("arbitrary", "arbitrary"),
        vmem_limit_bytes=_VMEM_LIMIT,
    )
    parallel_params = pltpu.CompilerParams(
        dimension_semantics=("parallel", "parallel"),
        vmem_limit_bytes=_VMEM_LIMIT,
    )

    # ---- Pass 1: Gram / sum statistics of g and x -------------------------
    gram_g, sum_g, gram_x, sum_x = pl.pallas_call(
        _stats_gx_kernel,
        out_shape=(
            jax.ShapeDtypeStruct((Cl, Cl), f32),
            jax.ShapeDtypeStruct((Cl, 1), f32),
            jax.ShapeDtypeStruct((Cg, Cg), f32),
            jax.ShapeDtypeStruct((Cg, 1), f32),
        ),
        grid=grid,
        in_specs=[tile_spec_g, tile_spec_x],
        out_specs=(const2d((Cl, Cl)), const2d((Cl, 1)),
                   const2d((Cg, Cg)), const2d((Cg, 1))),
        compiler_params=reduce_params,
    )(g3, x3)

    scale_g, shift_g = _fold_bn(gram_g, sum_g, wgT, gam_g, bet_g, m_tot)
    scale_x, shift_x = _fold_bn(gram_x, sum_x, wxT, gam_x, bet_x, m_tot)

    # ---- Pass 2: per-tile p and psi-BN statistics --------------------------
    p_full, sum_p, ssq_p = pl.pallas_call(
        _psi_stats_kernel,
        out_shape=(
            jax.ShapeDtypeStruct((N, 1, Ms), f32),
            jax.ShapeDtypeStruct((1, 1), f32),
            jax.ShapeDtypeStruct((1, 1), f32),
        ),
        grid=grid,
        in_specs=[
            tile_spec_g, tile_spec_x,
            const2d((F_int, Cl)), const2d((F_int, Cg)),
            const2d((F_int, 1)), const2d((F_int, 1)),
            const2d((F_int, 1)), const2d((F_int, 1)),
            const2d((F_int, 1)),
        ],
        out_specs=(tile_spec_p, const2d((1, 1)), const2d((1, 1))),
        compiler_params=reduce_params,
    )(g3, x3, wgT, wxT, scale_g, shift_g, scale_x, shift_x, wp_col)

    mean_p = sum_p / m_tot
    var_p = jnp.maximum(ssq_p / m_tot - mean_p * mean_p, 0.0)
    scale_p = gam_p * lax.rsqrt(var_p + _EPS)
    shift_p = bet_p - mean_p * scale_p

    # ---- Pass 3: gate the skip connection ----------------------------------
    out3 = pl.pallas_call(
        _gate_kernel,
        out_shape=jax.ShapeDtypeStruct((N, Cg, Ms), f32),
        grid=grid,
        in_specs=[tile_spec_x, tile_spec_p, const2d((1, 1)), const2d((1, 1))],
        out_specs=tile_spec_x,
        compiler_params=parallel_params,
    )(x3, p_full, scale_p, shift_p)

    return out3.reshape(N, Cg, D, H, W)


# --------------------------------------------------------------------------
# Pure-JAX reference matching the PyTorch forward (training-mode BN).
# --------------------------------------------------------------------------
def attention_block_ref(g, x, params):
    def bn(y, gam, bet):
        mu = jnp.mean(y, axis=0, keepdims=True)
        var = jnp.mean((y - mu) ** 2, axis=0, keepdims=True)
        return gam * (y - mu) / jnp.sqrt(var + _EPS) + bet

    N, Cl, D, H, W = g.shape
    _, Cg, _, _, _ = x.shape
    M = N * D * H * W
    gf = jnp.transpose(g, (0, 2, 3, 4, 1)).reshape(M, Cl)
    xf = jnp.transpose(x, (0, 2, 3, 4, 1)).reshape(M, Cg)

    g1 = bn(gf @ params["wg"] + params["bg"], params["gam_g"], params["bet_g"])
    x1 = bn(xf @ params["wx"] + params["bx"], params["gam_x"], params["bet_x"])
    s = jnp.maximum(g1 + x1, 0.0)
    p = bn(s @ params["wp"] + params["bp"], params["gam_p"], params["bet_p"])
    psi = jax.nn.sigmoid(p)
    out = xf * psi
    return jnp.transpose(out.reshape(N, D, H, W, Cg), (0, 4, 1, 2, 3))


def make_params(key, F_g, F_l, F_int):
    """Deterministic synthetic parameters (shapes match the nn.Module)."""
    ks = jax.random.split(key, 10)
    return {
        # W_g: Conv3d(F_l -> F_int, 1x1x1) stored as (Cin, Cout)
        "wg": jax.random.normal(ks[0], (F_l, F_int), jnp.float32) * 0.2,
        "bg": jax.random.normal(ks[1], (1, F_int), jnp.float32) * 0.1,
        "gam_g": 1.0 + 0.1 * jax.random.normal(ks[2], (1, F_int), jnp.float32),
        "bet_g": 0.1 * jax.random.normal(ks[3], (1, F_int), jnp.float32),
        # W_x: Conv3d(F_g -> F_int, 1x1x1)
        "wx": jax.random.normal(ks[4], (F_g, F_int), jnp.float32) * 0.2,
        "bx": jax.random.normal(ks[5], (1, F_int), jnp.float32) * 0.1,
        "gam_x": 1.0 + 0.1 * jax.random.normal(ks[6], (1, F_int), jnp.float32),
        "bet_x": 0.1 * jax.random.normal(ks[7], (1, F_int), jnp.float32),
        # psi: Conv3d(F_int -> 1, 1x1x1)
        "wp": jax.random.normal(ks[8], (F_int, 1), jnp.float32) * 0.2,
        "bp": 0.1 * jnp.ones((1, 1), jnp.float32),
        "gam_p": 1.2 * jnp.ones((1, 1), jnp.float32),
        "bet_p": -0.05 * jnp.ones((1, 1), jnp.float32),
    }


if __name__ == "__main__":
    # Small shapes consistent with the module: g has F_l channels (fed to W_g),
    # x has F_g channels (fed to W_x), as written in the PyTorch forward.
    N, F_g, F_l, F_int = 2, 4, 4, 8
    D, H, W = 4, 16, 16          # D*H*W = 1024 -> 4 M-tiles of 256 per batch

    key = jax.random.PRNGKey(0)
    kg, kx, kp = jax.random.split(key, 3)
    g = jax.random.normal(kg, (N, F_l, D, H, W), jnp.float32)
    x = jax.random.normal(kx, (N, F_g, D, H, W), jnp.float32)
    params = make_params(kp, F_g, F_l, F_int)

    fn = jax.jit(functools.partial(attention_block_pallas, tile_cap=256))
    out = jax.block_until_ready(fn(g, x, params))
    ref = jax.block_until_ready(attention_block_ref(g, x, params))

    assert out.shape == x.shape and out.dtype == jnp.float32
    assert jnp.allclose(out, ref, atol=1e-4, rtol=1e-4), "mismatch vs. JAX reference"
    print("KERNEL_OK")
</pallas_src>

<mosaic_0001>
module attributes {stable_mosaic.version = 11 : i64} {
  func.func @_stats_gx_kernel(%arg0: i32, %arg1: i32, %arg2: memref<1x4x256xf32, #tpu.memory_space<vmem>>, %arg3: memref<1x4x256xf32, #tpu.memory_space<vmem>>, %arg4: memref<4x4xf32, #tpu.memory_space<vmem>>, %arg5: memref<4x1xf32, #tpu.memory_space<vmem>>, %arg6: memref<4x4xf32, #tpu.memory_space<vmem>>, %arg7: memref<4x1xf32, #tpu.memory_space<vmem>>) attributes {dimension_semantics = [#tpu.dimension_semantics<arbitrary>, #tpu.dimension_semantics<arbitrary>], iteration_bounds = array<i64: 2, 4>, scalar_prefetch = 0 : i64, scratch_operands = 0 : i64, tpu.core_type = #tpu.core_type<tc>, window_params = [{transform_indices = @transform_0, window_bounds = array<i64: 1, 4, 256>}, {transform_indices = @transform_1, window_bounds = array<i64: 1, 4, 256>}, {pipeline_mode = #tpu.pipeline_mode<synchronous>, transform_indices = @transform_2, window_bounds = array<i64: 4, 4>}, {pipeline_mode = #tpu.pipeline_mode<synchronous>, transform_indices = @transform_3, window_bounds = array<i64: 4, 1>}, {pipeline_mode = #tpu.pipeline_mode<synchronous>, transform_indices = @transform_4, window_bounds = array<i64: 4, 4>}, {pipeline_mode = #tpu.pipeline_mode<synchronous>, transform_indices = @transform_5, window_bounds = array<i64: 4, 1>}]} {
    %c0_i32 = arith.constant 0 : i32
    %0 = arith.cmpi eq, %arg0, %c0_i32 : i32
    %c0_i32_0 = arith.constant 0 : i32
    %1 = arith.cmpi eq, %arg1, %c0_i32_0 : i32
    %2 = arith.andi %0, %1 : i1
    %3 = arith.extui %2 : i1 to i32
    %c0_i32_1 = arith.constant 0 : i32
    %4 = arith.cmpi ne, %3, %c0_i32_1 : i32
    scf.if %4 {
      %cst_26 = arith.constant 0.000000e+00 : f32
      %27 = vector.broadcast %cst_26 : f32 to vector<4x4xf32>
      %c0_27 = arith.constant 0 : index
      %c0_28 = arith.constant 0 : index
      %28 = vector.load %arg4[%c0_27, %c0_28] : memref<4x4xf32, #tpu.memory_space<vmem>>, vector<4x4xf32>
      tpu.vector_store %arg4[%c0_27, %c0_28], %27 {strides = array<i32>} : memref<4x4xf32, #tpu.memory_space<vmem>>, vector<4x4xf32>,
      %cst_29 = arith.constant 0.000000e+00 : f32
      %29 = vector.broadcast %cst_29 : f32 to vector<4x1xf32>
      %c0_30 = arith.constant 0 : index
      %c0_31 = arith.constant 0 : index
      %30 = vector.load %arg5[%c0_30, %c0_31] : memref<4x1xf32, #tpu.memory_space<vmem>>, vector<4x1xf32>
      tpu.vector_store %arg5[%c0_30, %c0_31], %29 {strides = array<i32>} : memref<4x1xf32, #tpu.memory_space<vmem>>, vector<4x1xf32>,
      %cst_32 = arith.constant 0.000000e+00 : f32
      %31 = vector.broadcast %cst_32 : f32 to vector<4x4xf32>
      %c0_33 = arith.constant 0 : index
      %c0_34 = arith.constant 0 : index
      %32 = vector.load %arg6[%c0_33, %c0_34] : memref<4x4xf32, #tpu.memory_space<vmem>>, vector<4x4xf32>
      tpu.vector_store %arg6[%c0_33, %c0_34], %31 {strides = array<i32>} : memref<4x4xf32, #tpu.memory_space<vmem>>, vector<4x4xf32>,
      %cst_35 = arith.constant 0.000000e+00 : f32
      %33 = vector.broadcast %cst_35 : f32 to vector<4x1xf32>
      %c0_36 = arith.constant 0 : index
      %c0_37 = arith.constant 0 : index
      %34 = vector.load %arg7[%c0_36, %c0_37] : memref<4x1xf32, #tpu.memory_space<vmem>>, vector<4x1xf32>
      tpu.vector_store %arg7[%c0_36, %c0_37], %33 {strides = array<i32>} : memref<4x1xf32, #tpu.memory_space<vmem>>, vector<4x1xf32>,
    } else {
    }
    %c0 = arith.constant 0 : index
    %c0_2 = arith.constant 0 : index
    %c0_3 = arith.constant 0 : index
    %5 = vector.load %arg2[%c0, %c0_2, %c0_3] : memref<1x4x256xf32, #tpu.memory_space<vmem>>, vector<1x4x256xf32>
    %6 = vector.shape_cast %5 : vector<1x4x256xf32> to vector<4x256xf32>
    %c0_4 = arith.constant 0 : index
    %c0_5 = arith.constant 0 : index
    %c0_6 = arith.constant 0 : index
    %7 = vector.load %arg3[%c0_4, %c0_5, %c0_6] : memref<1x4x256xf32, #tpu.memory_space<vmem>>, vector<1x4x256xf32>
    %8 = vector.shape_cast %7 : vector<1x4x256xf32> to vector<4x256xf32>
    %c0_7 = arith.constant 0 : index
    %c0_8 = arith.constant 0 : index
    %9 = vector.load %arg4[%c0_7, %c0_8] : memref<4x4xf32, #tpu.memory_space<vmem>>, vector<4x4xf32>
    %cst = arith.constant dense<0.000000e+00> : vector<4x4xf32>
    %10 = tpu.matmul %6, %6, %cst {dimension_numbers = #tpu.dot_dimension_numbers<[1], [1], [0], [0], [0, 0, 1, 0], [], []>} : vector<4x256xf32>, vector<4x256xf32>, vector<4x4xf32> -> vector<4x4xf32>
    %11 = arith.addf %9, %10 : vector<4x4xf32>
    %c0_9 = arith.constant 0 : index
    %c0_10 = arith.constant 0 : index
    %12 = vector.load %arg4[%c0_9, %c0_10] : memref<4x4xf32, #tpu.memory_space<vmem>>, vector<4x4xf32>
    tpu.vector_store %arg4[%c0_9, %c0_10], %11 {strides = array<i32>} : memref<4x4xf32, #tpu.memory_space<vmem>>, vector<4x4xf32>,
    %c0_11 = arith.constant 0 : index
    %c0_12 = arith.constant 0 : index
    %13 = vector.load %arg6[%c0_11, %c0_12] : memref<4x4xf32, #tpu.memory_space<vmem>>, vector<4x4xf32>
    %cst_13 = arith.constant dense<0.000000e+00> : vector<4x4xf32>
    %14 = tpu.matmul %8, %8, %cst_13 {dimension_numbers = #tpu.dot_dimension_numbers<[1], [1], [0], [0], [0, 0, 1, 0], [], []>} : vector<4x256xf32>, vector<4x256xf32>, vector<4x4xf32> -> vector<4x4xf32>
    %15 = arith.addf %13, %14 : vector<4x4xf32>
    %c0_14 = arith.constant 0 : index
    %c0_15 = arith.constant 0 : index
    %16 = vector.load %arg6[%c0_14, %c0_15] : memref<4x4xf32, #tpu.memory_space<vmem>>, vector<4x4xf32>
    tpu.vector_store %arg6[%c0_14, %c0_15], %15 {strides = array<i32>} : memref<4x4xf32, #tpu.memory_space<vmem>>, vector<4x4xf32>,
    %c0_16 = arith.constant 0 : index
    %c0_17 = arith.constant 0 : index
    %17 = vector.load %arg5[%c0_16, %c0_17] : memref<4x1xf32, #tpu.memory_space<vmem>>, vector<4x1xf32>
    %cst_18 = arith.constant dense<0.000000e+00> : vector<4xf32>
    %18 = vector.multi_reduction <add>, %6, %cst_18 [1] : vector<4x256xf32> to vector<4xf32>
    %19 = vector.shape_cast %18 : vector<4xf32> to vector<4x1xf32>
    %20 = arith.addf %17, %19 : vector<4x1xf32>
    %c0_19 = arith.constant 0 : index
    %c0_20 = arith.constant 0 : index
    %21 = vector.load %arg5[%c0_19, %c0_20] : memref<4x1xf32, #tpu.memory_space<vmem>>, vector<4x1xf32>
    tpu.vector_store %arg5[%c0_19, %c0_20], %20 {strides = array<i32>} : memref<4x1xf32, #tpu.memory_space<vmem>>, vector<4x1xf32>,
    %c0_21 = arith.constant 0 : index
    %c0_22 = arith.constant 0 : index
    %22 = vector.load %arg7[%c0_21, %c0_22] : memref<4x1xf32, #tpu.memory_space<vmem>>, vector<4x1xf32>
    %cst_23 = arith.constant dense<0.000000e+00> : vector<4xf32>
    %23 = vector.multi_reduction <add>, %8, %cst_23 [1] : vector<4x256xf32> to vector<4xf32>
    %24 = vector.shape_cast %23 : vector<4xf32> to vector<4x1xf32>
    %25 = arith.addf %22, %24 : vector<4x1xf32>
    %c0_24 = arith.constant 0 : index
    %c0_25 = arith.constant 0 : index
    %26 = vector.load %arg7[%c0_24, %c0_25] : memref<4x1xf32, #tpu.memory_space<vmem>>, vector<4x1xf32>
    tpu.vector_store %arg7[%c0_24, %c0_25], %25 {strides = array<i32>} : memref<4x1xf32, #tpu.memory_space<vmem>>, vector<4x1xf32>,
    return
  }
  func.func @transform_0(%arg0: i32, %arg1: i32) -> (i32, i32, i32) {
    %c0_i32 = arith.constant 0 : i32
    %c0_i32_0 = arith.constant 0 : i32
    return %arg0, %c0_i32, %arg1 : i32, i32, i32
  }
  func.func @transform_1(%arg0: i32, %arg1: i32) -> (i32, i32, i32) {
    %c0_i32 = arith.constant 0 : i32
    %c0_i32_0 = arith.constant 0 : i32
    return %arg0, %c0_i32, %arg1 : i32, i32, i32
  }
  func.func @transform_2(%arg0: i32, %arg1: i32) -> (i32, i32) {
    %c0_i32 = arith.constant 0 : i32
    %c0_i32_0 = arith.constant 0 : i32
    %c0_i32_1 = arith.constant 0 : i32
    return %c0_i32, %c0_i32_0 : i32, i32
  }
  func.func @transform_3(%arg0: i32, %arg1: i32) -> (i32, i32) {
    %c0_i32 = arith.constant 0 : i32
    %c0_i32_0 = arith.constant 0 : i32
    %c0_i32_1 = arith.constant 0 : i32
    return %c0_i32, %c0_i32_0 : i32, i32
  }
  func.func @transform_4(%arg0: i32, %arg1: i32) -> (i32, i32) {
    %c0_i32 = arith.constant 0 : i32
    %c0_i32_0 = arith.constant 0 : i32
    %c0_i32_1 = arith.constant 0 : i32
    return %c0_i32, %c0_i32_0 : i32, i32
  }
  func.func @transform_5(%arg0: i32, %arg1: i32) -> (i32, i32) {
    %c0_i32 = arith.constant 0 : i32
    %c0_i32_0 = arith.constant 0 : i32
    %c0_i32_1 = arith.constant 0 : i32
    return %c0_i32, %c0_i32_0 : i32, i32
  }
}

module attributes {stable_mosaic.version = 11 : i64} {
  func.func @_gate_kernel(%arg0: i32, %arg1: i32, %arg2: memref<1x4x256xf32, #tpu.memory_space<vmem>>, %arg3: memref<1x1x256xf32, #tpu.memory_space<vmem>>, %arg4: memref<1x1xf32, #tpu.memory_space<vmem>>, %arg5: memref<1x1xf32, #tpu.memory_space<vmem>>, %arg6: memref<1x4x256xf32, #tpu.memory_space<vmem>>) attributes {dimension_semantics = [#tpu.dimension_semantics<parallel>, #tpu.dimension_semantics<parallel>], iteration_bounds = array<i64: 2, 4>, scalar_prefetch = 0 : i64, scratch_operands = 0 : i64, tpu.core_type = #tpu.core_type<tc>, window_params = [{transform_indices = @transform_0, window_bounds = array<i64: 1, 4, 256>}, {transform_indices = @transform_1, window_bounds = array<i64: 1, 1, 256>}, {pipeline_mode = #tpu.pipeline_mode<synchronous>, transform_indices = @transform_2, window_bounds = array<i64: 1, 1>}, {pipeline_mode = #tpu.pipeline_mode<synchronous>, transform_indices = @transform_3, window_bounds = array<i64: 1, 1>}, {transform_indices = @transform_4, window_bounds = array<i64: 1, 4, 256>}]} {
    %c0 = arith.constant 0 : index
    %c0_0 = arith.constant 0 : index
    %c0_1 = arith.constant 0 : index
    %0 = vector.load %arg3[%c0, %c0_0, %c0_1] : memref<1x1x256xf32, #tpu.memory_space<vmem>>, vector<1x1x256xf32>
    %1 = vector.shape_cast %0 : vector<1x1x256xf32> to vector<1x256xf32>
    %c0_2 = arith.constant 0 : index
    %c0_3 = arith.constant 0 : index
    %2 = vector.load %arg4[%c0_2, %c0_3] : memref<1x1xf32, #tpu.memory_space<vmem>>, vector<1x1xf32>
    %3 = vector.broadcast %2 : vector<1x1xf32> to vector<1x256xf32>
    %4 = arith.mulf %1, %3 : vector<1x256xf32>
    %c0_4 = arith.constant 0 : index
    %c0_5 = arith.constant 0 : index
    %5 = vector.load %arg5[%c0_4, %c0_5] : memref<1x1xf32, #tpu.memory_space<vmem>>, vector<1x1xf32>
    %6 = vector.broadcast %5 : vector<1x1xf32> to vector<1x256xf32>
    %7 = arith.addf %4, %6 : vector<1x256xf32>
    %8 = arith.negf %7 : vector<1x256xf32>
    %9 = math.exp %8 : vector<1x256xf32>
    %cst = arith.constant 1.000000e+00 : f32
    %10 = vector.broadcast %cst : f32 to vector<1x256xf32>
    %11 = arith.addf %10, %9 : vector<1x256xf32>
    %12 = arith.divf %10, %11 : vector<1x256xf32>
    %c0_6 = arith.constant 0 : index
    %c0_7 = arith.constant 0 : index
    %c0_8 = arith.constant 0 : index
    %13 = vector.load %arg2[%c0_6, %c0_7, %c0_8] : memref<1x4x256xf32, #tpu.memory_space<vmem>>, vector<1x4x256xf32>
    %14 = vector.shape_cast %13 : vector<1x4x256xf32> to vector<4x256xf32>
    %15 = vector.broadcast %12 : vector<1x256xf32> to vector<4x256xf32>
    %16 = arith.mulf %14, %15 : vector<4x256xf32>
    %c0_9 = arith.constant 0 : index
    %c0_10 = arith.constant 0 : index
    %c0_11 = arith.constant 0 : index
    %17 = vector.load %arg6[%c0_9, %c0_10, %c0_11] : memref<1x4x256xf32, #tpu.memory_space<vmem>>, vector<1x4x256xf32>
    %18 = vector.shape_cast %17 : vector<1x4x256xf32> to vector<4x256xf32>
    %19 = vector.shape_cast %16 : vector<4x256xf32> to vector<1x4x256xf32>
    tpu.vector_store %arg6[%c0_9, %c0_10, %c0_11], %19 {strides = array<i32>} : memref<1x4x256xf32, #tpu.memory_space<vmem>>, vector<1x4x256xf32>,
    return
  }
  func.func @transform_0(%arg0: i32, %arg1: i32) -> (i32, i32, i32) {
    %c0_i32 = arith.constant 0 : i32
    %c0_i32_0 = arith.constant 0 : i32
    return %arg0, %c0_i32, %arg1 : i32, i32, i32
  }
  func.func @transform_1(%arg0: i32, %arg1: i32) -> (i32, i32, i32) {
    %c0_i32 = arith.constant 0 : i32
    %c0_i32_0 = arith.constant 0 : i32
    return %arg0, %c0_i32, %arg1 : i32, i32, i32
  }
  func.func @transform_2(%arg0: i32, %arg1: i32) -> (i32, i32) {
    %c0_i32 = arith.constant 0 : i32
    %c0_i32_0 = arith.constant 0 : i32
    %c0_i32_1 = arith.constant 0 : i32
    return %c0_i32, %c0_i32_0 : i32, i32
  }
  func.func @transform_3(%arg0: i32, %arg1: i32) -> (i32, i32) {
    %c0_i32 = arith.constant 0 : i32
    %c0_i32_0 = arith.constant 0 : i32
    %c0_i32_1 = arith.constant 0 : i32
    return %c0_i32, %c0_i32_0 : i32, i32
  }
  func.func @transform_4(%arg0: i32, %arg1: i32) -> (i32, i32, i32) {
    %c0_i32 = arith.constant 0 : i32
    %c0_i32_0 = arith.constant 0 : i32
    return %arg0, %c0_i32, %arg1 : i32, i32, i32
  }
}

module attributes {stable_mosaic.version = 11 : i64} {
  func.func @_psi_stats_kernel(%arg0: i32, %arg1: i32, %arg2: memref<1x4x256xf32, #tpu.memory_space<vmem>>, %arg3: memref<1x4x256xf32, #tpu.memory_space<vmem>>, %arg4: memref<8x4xf32, #tpu.memory_space<vmem>>, %arg5: memref<8x4xf32, #tpu.memory_space<vmem>>, %arg6: memref<8x1xf32, #tpu.memory_space<vmem>>, %arg7: memref<8x1xf32, #tpu.memory_space<vmem>>, %arg8: memref<8x1xf32, #tpu.memory_space<vmem>>, %arg9: memref<8x1xf32, #tpu.memory_space<vmem>>, %arg10: memref<8x1xf32, #tpu.memory_space<vmem>>, %arg11: memref<1x1x256xf32, #tpu.memory_space<vmem>>, %arg12: memref<1x1xf32, #tpu.memory_space<vmem>>, %arg13: memref<1x1xf32, #tpu.memory_space<vmem>>) attributes {dimension_semantics = [#tpu.dimension_semantics<arbitrary>, #tpu.dimension_semantics<arbitrary>], iteration_bounds = array<i64: 2, 4>, scalar_prefetch = 0 : i64, scratch_operands = 0 : i64, tpu.core_type = #tpu.core_type<tc>, window_params = [{transform_indices = @transform_0, window_bounds = array<i64: 1, 4, 256>}, {transform_indices = @transform_1, window_bounds = array<i64: 1, 4, 256>}, {pipeline_mode = #tpu.pipeline_mode<synchronous>, transform_indices = @transform_2, window_bounds = array<i64: 8, 4>}, {pipeline_mode = #tpu.pipeline_mode<synchronous>, transform_indices = @transform_3, window_bounds = array<i64: 8, 4>}, {pipeline_mode = #tpu.pipeline_mode<synchronous>, transform_indices = @transform_4, window_bounds = array<i64: 8, 1>}, {pipeline_mode = #tpu.pipeline_mode<synchronous>, transform_indices = @transform_5, window_bounds = array<i64: 8, 1>}, {pipeline_mode = #tpu.pipeline_mode<synchronous>, transform_indices = @transform_6, window_bounds = array<i64: 8, 1>}, {pipeline_mode = #tpu.pipeline_mode<synchronous>, transform_indices = @transform_7, window_bounds = array<i64: 8, 1>}, {pipeline_mode = #tpu.pipeline_mode<synchronous>, transform_indices = @transform_8, window_bounds = array<i64: 8, 1>}, {transform_indices = @transform_9, window_bounds = array<i64: 1, 1, 256>}, {pipeline_mode = #tpu.pipeline_mode<synchronous>, transform_indices = @transform_10, window_bounds = array<i64: 1, 1>}, {pipeline_mode = #tpu.pipeline_mode<synchronous>, transform_indices = @transform_11, window_bounds = array<i64: 1, 1>}]} {
    %c0_i32 = arith.constant 0 : i32
    %0 = arith.cmpi eq, %arg0, %c0_i32 : i32
    %c0_i32_0 = arith.constant 0 : i32
    %1 = arith.cmpi eq, %arg1, %c0_i32_0 : i32
    %2 = arith.andi %0, %1 : i1
    %3 = arith.extui %2 : i1 to i32
    %c0_i32_1 = arith.constant 0 : i32
    %4 = arith.cmpi ne, %3, %c0_i32_1 : i32
    scf.if %4 {
      %cst_37 = arith.constant 0.000000e+00 : f32
      %47 = vector.broadcast %cst_37 : f32 to vector<1x1xf32>
      %c0_38 = arith.constant 0 : index
      %c0_39 = arith.constant 0 : index
      %48 = vector.load %arg12[%c0_38, %c0_39] : memref<1x1xf32, #tpu.memory_space<vmem>>, vector<1x1xf32>
      tpu.vector_store %arg12[%c0_38, %c0_39], %47 {strides = array<i32>} : memref<1x1xf32, #tpu.memory_space<vmem>>, vector<1x1xf32>,
      %cst_40 = arith.constant 0.000000e+00 : f32
      %49 = vector.broadcast %cst_40 : f32 to vector<1x1xf32>
      %c0_41 = arith.constant 0 : index
      %c0_42 = arith.constant 0 : index
      %50 = vector.load %arg13[%c0_41, %c0_42] : memref<1x1xf32, #tpu.memory_space<vmem>>, vector<1x1xf32>
      tpu.vector_store %arg13[%c0_41, %c0_42], %49 {strides = array<i32>} : memref<1x1xf32, #tpu.memory_space<vmem>>, vector<1x1xf32>,
    } else {
    }
    %c0 = arith.constant 0 : index
    %c0_2 = arith.constant 0 : index
    %c0_3 = arith.constant 0 : index
    %5 = vector.load %arg2[%c0, %c0_2, %c0_3] : memref<1x4x256xf32, #tpu.memory_space<vmem>>, vector<1x4x256xf32>
    %6 = vector.shape_cast %5 : vector<1x4x256xf32> to vector<4x256xf32>
    %c0_4 = arith.constant 0 : index
    %c0_5 = arith.constant 0 : index
    %c0_6 = arith.constant 0 : index
    %7 = vector.load %arg3[%c0_4, %c0_5, %c0_6] : memref<1x4x256xf32, #tpu.memory_space<vmem>>, vector<1x4x256xf32>
    %8 = vector.shape_cast %7 : vector<1x4x256xf32> to vector<4x256xf32>
    %c0_7 = arith.constant 0 : index
    %c0_8 = arith.constant 0 : index
    %9 = vector.load %arg4[%c0_7, %c0_8] : memref<8x4xf32, #tpu.memory_space<vmem>>, vector<8x4xf32>
    %cst = arith.constant dense<0.000000e+00> : vector<8x256xf32>
    %10 = tpu.matmul %9, %6, %cst {dimension_numbers = #tpu.dot_dimension_numbers<[1], [0], [0], [1], [0, 0, 1, 1], [], []>} : vector<8x4xf32>, vector<4x256xf32>, vector<8x256xf32> -> vector<8x256xf32>
    %c0_9 = arith.constant 0 : index
    %c0_10 = arith.constant 0 : index
    %11 = vector.load %arg5[%c0_9, %c0_10] : memref<8x4xf32, #tpu.memory_space<vmem>>, vector<8x4xf32>
    %cst_11 = arith.constant dense<0.000000e+00> : vector<8x256xf32>
    %12 = tpu.matmul %11, %8, %cst_11 {dimension_numbers = #tpu.dot_dimension_numbers<[1], [0], [0], [1], [0, 0, 1, 1], [], []>} : vector<8x4xf32>, vector<4x256xf32>, vector<8x256xf32> -> vector<8x256xf32>
    %c0_12 = arith.constant 0 : index
    %c0_13 = arith.constant 0 : index
    %13 = vector.load %arg6[%c0_12, %c0_13] : memref<8x1xf32, #tpu.memory_space<vmem>>, vector<8x1xf32>
    %14 = vector.broadcast %13 : vector<8x1xf32> to vector<8x256xf32>
    %15 = arith.mulf %10, %14 : vector<8x256xf32>
    %c0_14 = arith.constant 0 : index
    %c0_15 = arith.constant 0 : index
    %16 = vector.load %arg7[%c0_14, %c0_15] : memref<8x1xf32, #tpu.memory_space<vmem>>, vector<8x1xf32>
    %17 = vector.broadcast %16 : vector<8x1xf32> to vector<8x256xf32>
    %18 = arith.addf %15, %17 : vector<8x256xf32>
    %c0_16 = arith.constant 0 : index
    %c0_17 = arith.constant 0 : index
    %19 = vector.load %arg8[%c0_16, %c0_17] : memref<8x1xf32, #tpu.memory_space<vmem>>, vector<8x1xf32>
    %20 = vector.broadcast %19 : vector<8x1xf32> to vector<8x256xf32>
    %21 = arith.mulf %12, %20 : vector<8x256xf32>
    %22 = arith.addf %18, %21 : vector<8x256xf32>
    %c0_18 = arith.constant 0 : index
    %c0_19 = arith.constant 0 : index
    %23 = vector.load %arg9[%c0_18, %c0_19] : memref<8x1xf32, #tpu.memory_space<vmem>>, vector<8x1xf32>
    %24 = vector.broadcast %23 : vector<8x1xf32> to vector<8x256xf32>
    %25 = arith.addf %22, %24 : vector<8x256xf32>
    %cst_20 = arith.constant 0.000000e+00 : f32
    %26 = vector.broadcast %cst_20 : f32 to vector<8x256xf32>
    %27 = arith.maximumf %25, %26 : vector<8x256xf32>
    %c0_21 = arith.constant 0 : index
    %c0_22 = arith.constant 0 : index
    %28 = vector.load %arg10[%c0_21, %c0_22] : memref<8x1xf32, #tpu.memory_space<vmem>>, vector<8x1xf32>
    %29 = vector.broadcast %28 : vector<8x1xf32> to vector<8x256xf32>
    %30 = arith.mulf %27, %29 : vector<8x256xf32>
    %cst_23 = arith.constant dense<0.000000e+00> : vector<256xf32>
    %31 = vector.multi_reduction <add>, %30, %cst_23 [0] : vector<8x256xf32> to vector<256xf32>
    %32 = vector.shape_cast %31 : vector<256xf32> to vector<1x256xf32>
    %c0_24 = arith.constant 0 : index
    %c0_25 = arith.constant 0 : index
    %c0_26 = arith.constant 0 : index
    %33 = vector.load %arg11[%c0_24, %c0_25, %c0_26] : memref<1x1x256xf32, #tpu.memory_space<vmem>>, vector<1x1x256xf32>
    %34 = vector.shape_cast %33 : vector<1x1x256xf32> to vector<1x256xf32>
    %35 = vector.shape_cast %32 : vector<1x256xf32> to vector<1x1x256xf32>
    tpu.vector_store %arg11[%c0_24, %c0_25, %c0_26], %35 {strides = array<i32>} : memref<1x1x256xf32, #tpu.memory_space<vmem>>, vector<1x1x256xf32>,
    %c0_27 = arith.constant 0 : index
    %c0_28 = arith.constant 0 : index
    %36 = vector.load %arg12[%c0_27, %c0_28] : memref<1x1xf32, #tpu.memory_space<vmem>>, vector<1x1xf32>
    %cst_29 = arith.constant dense<0.000000e+00> : vector<1xf32>
    %37 = vector.multi_reduction <add>, %32, %cst_29 [1] : vector<1x256xf32> to vector<1xf32>
    %38 = vector.shape_cast %37 : vector<1xf32> to vector<1x1xf32>
    %39 = arith.addf %36, %38 : vector<1x1xf32>
    %c0_30 = arith.constant 0 : index
    %c0_31 = arith.constant 0 : index
    %40 = vector.load %arg12[%c0_30, %c0_31] : memref<1x1xf32, #tpu.memory_space<vmem>>, vector<1x1xf32>
    tpu.vector_store %arg12[%c0_30, %c0_31], %39 {strides = array<i32>} : memref<1x1xf32, #tpu.memory_space<vmem>>, vector<1x1xf32>,
    %c0_32 = arith.constant 0 : index
    %c0_33 = arith.constant 0 : index
    %41 = vector.load %arg13[%c0_32, %c0_33] : memref<1x1xf32, #tpu.memory_space<vmem>>, vector<1x1xf32>
    %42 = arith.mulf %32, %32 : vector<1x256xf32>
    %cst_34 = arith.constant dense<0.000000e+00> : vector<1xf32>
    %43 = vector.multi_reduction <add>, %42, %cst_34 [1] : vector<1x256xf32> to vector<1xf32>
    %44 = vector.shape_cast %43 : vector<1xf32> to vector<1x1xf32>
    %45 = arith.addf %41, %44 : vector<1x1xf32>
    %c0_35 = arith.constant 0 : index
    %c0_36 = arith.constant 0 : index
    %46 = vector.load %arg13[%c0_35, %c0_36] : memref<1x1xf32, #tpu.memory_space<vmem>>, vector<1x1xf32>
    tpu.vector_store %arg13[%c0_35, %c0_36], %45 {strides = array<i32>} : memref<1x1xf32, #tpu.memory_space<vmem>>, vector<1x1xf32>,
    return
  }
  func.func @transform_0(%arg0: i32, %arg1: i32) -> (i32, i32, i32) {
    %c0_i32 = arith.constant 0 : i32
    %c0_i32_0 = arith.constant 0 : i32
    return %arg0, %c0_i32, %arg1 : i32, i32, i32
  }
  func.func @transform_1(%arg0: i32, %arg1: i32) -> (i32, i32, i32) {
    %c0_i32 = arith.constant 0 : i32
    %c0_i32_0 = arith.constant 0 : i32
    return %arg0, %c0_i32, %arg1 : i32, i32, i32
  }
  func.func @transform_2(%arg0: i32, %arg1: i32) -> (i32, i32) {
    %c0_i32 = arith.constant 0 : i32
    %c0_i32_0 = arith.constant 0 : i32
    %c0_i32_1 = arith.constant 0 : i32
    return %c0_i32, %c0_i32_0 : i32, i32
  }
  func.func @transform_3(%arg0: i32, %arg1: i32) -> (i32, i32) {
    %c0_i32 = arith.constant 0 : i32
    %c0_i32_0 = arith.constant 0 : i32
    %c0_i32_1 = arith.constant 0 : i32
    return %c0_i32, %c0_i32_0 : i32, i32
  }
  func.func @transform_4(%arg0: i32, %arg1: i32) -> (i32, i32) {
    %c0_i32 = arith.constant 0 : i32
    %c0_i32_0 = arith.constant 0 : i32
    %c0_i32_1 = arith.constant 0 : i32
    return %c0_i32, %c0_i32_0 : i32, i32
  }
  func.func @transform_5(%arg0: i32, %arg1: i32) -> (i32, i32) {
    %c0_i32 = arith.constant 0 : i32
    %c0_i32_0 = arith.constant 0 : i32
    %c0_i32_1 = arith.constant 0 : i32
    return %c0_i32, %c0_i32_0 : i32, i32
  }
  func.func @transform_6(%arg0: i32, %arg1: i32) -> (i32, i32) {
    %c0_i32 = arith.constant 0 : i32
    %c0_i32_0 = arith.constant 0 : i32
    %c0_i32_1 = arith.constant 0 : i32
    return %c0_i32, %c0_i32_0 : i32, i32
  }
  func.func @transform_7(%arg0: i32, %arg1: i32) -> (i32, i32) {
    %c0_i32 = arith.constant 0 : i32
    %c0_i32_0 = arith.constant 0 : i32
    %c0_i32_1 = arith.constant 0 : i32
    return %c0_i32, %c0_i32_0 : i32, i32
  }
  func.func @transform_8(%arg0: i32, %arg1: i32) -> (i32, i32) {
    %c0_i32 = arith.constant 0 : i32
    %c0_i32_0 = arith.constant 0 : i32
    %c0_i32_1 = arith.constant 0 : i32
    return %c0_i32, %c0_i32_0 : i32, i32
  }
  func.func @transform_9(%arg0: i32, %arg1: i32) -> (i32, i32, i32) {
    %c0_i32 = arith.constant 0 : i32
    %c0_i32_0 = arith.constant 0 : i32
    return %arg0, %c0_i32, %arg1 : i32, i32, i32
  }
  func.func @transform_10(%arg0: i32, %arg1: i32) -> (i32, i32) {
    %c0_i32 = arith.constant 0 : i32
    %c0_i32_0 = arith.constant 0 : i32
    %c0_i32_1 = arith.constant 0 : i32
    return %c0_i32, %c0_i32_0 : i32, i32
  }
  func.func @transform_11(%arg0: i32, %arg1: i32) -> (i32, i32) {
    %c0_i32 = arith.constant 0 : i32
    %c0_i32_0 = arith.constant 0 : i32
    %c0_i32_1 = arith.constant 0 : i32
    return %c0_i32, %c0_i32_0 : i32, i32
  }
}

</mosaic_0001>

<llo_original>
// kernel: attention_block_pallas.5
$region0: #{attention_block_pallas.5}
  #allocation0 [shape = 'u32[]', space=smem, size = 0x4, offset = 0x4, fixed_abs, tag = 'smem constant byte address 0x4 - core index']
  #allocation1 [shape = 'u32[144,128]{1,0:T(1,128)}', space=vmem, size = 0x12000, scoped, tag = 'internal scratch']
  #allocation2 [shape = 'f32[1,1]{1,0:T(1,128)S(1)}', space=vmem, size = 0x200, scoped, tag = 'scoped memory for attention_block_pallas.5']
  #allocation3 [shape = 'f32[1,1]{1,0:T(1,128)S(1)}', space=vmem, size = 0x200, scoped, tag = 'scoped memory for attention_block_pallas.5']
  %s0 = inlined_call_operand.vmem [shape: f32[2,4,1024], index: 0, kind: input, shape index: {}]
  %s1 = inlined_call_operand.vmem [shape: f32[2,1,1024], index: 1, kind: input, shape index: {}]
  %s2 = inlined_call_operand.<no memory space> [shape: f32[1,1], index: 2, kind: input, shape index: {}]
  %s3 = inlined_call_operand.<no memory space> [shape: f32[1,1], index: 3, kind: input, shape index: {}]
  %s4 = inlined_call_operand.vmem [shape: f32[2,4,1024], index: 4, kind: output, shape index: {}]
  %s5 = sld [smem:[#allocation0]]
  $region49: #{attention_block_pallas.5} parent=0
    _
  %s7 = ssub.s32 1, %s5
  %s8 = scalar_select 0, %s7, %s5
  %v9 = vstv %s2
  %10 = vst [vmem:[#allocation2] sm:$0x1] %v9
  %v11 = vstv %s3
  %12 = vst [vmem:[#allocation3] sm:$0x1] %v11
  loop: start=0, step=1, limit=10
  $region2: #{attention_block_pallas.5} parent=0 // loop_pre_header
    _
  $region3: #{attention_block_pallas.5} parent=0 // loop_header
    %s14 = sphi 0, %s18
    %p15 = scmp.ge.s32.totalorder %s14, 10
    %s21 = sphi 0, %s33
    %s22 = sphi 0, %s29
    %s23 = sphi 0, %s21
    %s24 = sphi 0, %s22
    %s25 = sphi 0, %s23
    %s26 = sphi 0, %s24
    %s38 = sphi 0, %s40
    %s41 = sphi 0, %s38
    %s42 = sphi 0, %s41
    %s58 = sphi 0, %s42
    %s66 = sphi 0, %s68
    %s69 = sphi 0, %s66
    %s70 = sphi 0, %s69
    %s86 = sphi 0, %s70
    %s90 = sphi 0, %s90
    %s92 = sphi 0, %s90
    %s93 = sphi 0, %s92
    %s107 = sphi 0, %s93
    %s111 = sphi 0, %s111
    %s113 = sphi 0, %s111
    %s114 = sphi 0, %s113
    %s128 = sphi 0, %s114
    %s136 = sphi 0, %s138
    %s139 = sphi 0, %s136
    %s140 = sphi 0, %s139
    %s156 = sphi 0, %s140
  $region4: #{attention_block_pallas.5} parent=0 // loop_header_branch
    %17 = sbr.rel (%p15) target = $region8
  $region5: #{attention_block_pallas.5} parent=0 // loop_body
    %s19 = ssub.s32 %s14, 1
    %s20 = ssub.s32 %s14, 2
    %s27 = sadd.s32 1, %s22
    %p28 = scmp.ge.s32.totalorder %s27, 4
    %s29 = scalar_select %p28, 0, %s27
    %s30 = sadd.s32 1, %s21
    %s31 = scalar_select %p28, %s30, %s21
    %p32 = scmp.ge.s32.totalorder %s31, 2
    %s33 = scalar_select %p32, 0, %s31
    %s34 = ssub.s32 %s21, %s33
    %s35 = ssub.s32 %s22, %s29
    %s36 = sor.u32 %s34, %s35
    %p37 = scmp.eq.s32.totalorder %s36, 0
    %s39 = sadd.s32 %s38, 1
    %s40 = scalar_select %p37, %s38, %s39
    %p43 = pneg %p37
    %p44 = scmp.eq.s32.totalorder %s14, 7
    %p45 = por %p43, %p44
    %p46 = scmp.ne.s32.totalorder %s38, %s41
    %p47 = scmp.eq.s32.totalorder %s14, 0
    %p48 = por %p46, %p47
    %p49 = scmp.ne.s32.totalorder %s38, %s41
    %p50 = scmp.eq.s32.totalorder %s19, 7
    %p51 = por %p49, %p50
    %p52 = scmp.ne.s32.totalorder %s41, %s42
    %p53 = scmp.eq.s32.totalorder %s19, 0
    %p54 = por %p52, %p53
    %p55 = scmp.ne.s32.totalorder %s41, %s42
    %p56 = scmp.eq.s32.totalorder %s20, 7
    %p57 = por %p55, %p56
    %p59 = scmp.ne.s32.totalorder %s42, %s58
    %p60 = scmp.eq.s32.totalorder %s20, 0
    %p61 = por %p59, %p60
    %s62 = ssub.s32 %s21, %s33
    %s63 = ssub.s32 %s22, %s29
    %s64 = sor.u32 %s62, %s63
    %p65 = scmp.eq.s32.totalorder %s64, 0
    %s67 = sadd.s32 %s66, 1
    %s68 = scalar_select %p65, %s66, %s67
    %p71 = pneg %p65
    %p72 = scmp.eq.s32.totalorder %s14, 7
    %p73 = por %p71, %p72
    %p74 = scmp.ne.s32.totalorder %s66, %s69
    %p75 = scmp.eq.s32.totalorder %s14, 0
    %p76 = por %p74, %p75
    %p77 = scmp.ne.s32.totalorder %s66, %s69
    %p78 = scmp.eq.s32.totalorder %s19, 7
    %p79 = por %p77, %p78
    %p80 = scmp.ne.s32.totalorder %s69, %s70
    %p81 = scmp.eq.s32.totalorder %s19, 0
    %p82 = por %p80, %p81
    %p83 = scmp.ne.s32.totalorder %s69, %s70
    %p84 = scmp.eq.s32.totalorder %s20, 7
    %p85 = por %p83, %p84
    %p87 = scmp.ne.s32.totalorder %s70, %s86
    %p88 = scmp.eq.s32.totalorder %s20, 0
    %p89 = por %p87, %p88
    %s91 = sadd.s32 %s90, 1
    %p94 = scmp.eq.s32.totalorder %s14, 7
    %p95 = scmp.ne.s32.totalorder %s90, %s92
    %p96 = scmp.eq.s32.totalorder %s14, 0
    %p97 = por %p95, %p96
    %p98 = scmp.ne.s32.totalorder %s90, %s92
    %p99 = scmp.eq.s32.totalorder %s19, 7
    %p100 = por %p98, %p99
    %p101 = scmp.ne.s32.totalorder %s92, %s93
    %p102 = scmp.eq.s32.totalorder %s19, 0
    %p103 = por %p101, %p102
    %p104 = scmp.ne.s32.totalorder %s92, %s93
    %p105 = scmp.eq.s32.totalorder %s20, 7
    %p106 = por %p104, %p105
    %p108 = scmp.ne.s32.totalorder %s93, %s107
    %p109 = scmp.eq.s32.totalorder %s20, 0
    %p110 = por %p108, %p109
    %s112 = sadd.s32 %s111, 1
    %p115 = scmp.eq.s32.totalorder %s14, 7
    %p116 = scmp.ne.s32.totalorder %s111, %s113
    %p117 = scmp.eq.s32.totalorder %s14, 0
    %p118 = por %p116, %p117
    %p119 = scmp.ne.s32.totalorder %s111, %s113
    %p120 = scmp.eq.s32.totalorder %s19, 7
    %p121 = por %p119, %p120
    %p122 = scmp.ne.s32.totalorder %s113, %s114
    %p123 = scmp.eq.s32.totalorder %s19, 0
    %p124 = por %p122, %p123
    %p125 = scmp.ne.s32.totalorder %s113, %s114
    %p126 = scmp.eq.s32.totalorder %s20, 7
    %p127 = por %p125, %p126
    %p129 = scmp.ne.s32.totalorder %s114, %s128
    %p130 = scmp.eq.s32.totalorder %s20, 0
    %p131 = por %p129, %p130
    %s132 = ssub.s32 %s21, %s33
    %s133 = ssub.s32 %s22, %s29
    %s134 = sor.u32 %s132, %s133
    %p135 = scmp.eq.s32.totalorder %s134, 0
    %s137 = sadd.s32 %s136, 1
    %s138 = scalar_select %p135, %s136, %s137
    %p141 = pneg %p135
    %p142 = scmp.eq.s32.totalorder %s14, 7
    %p143 = por %p141, %p142
    %p144 = scmp.ne.s32.totalorder %s136, %s139
    %p145 = scmp.eq.s32.totalorder %s14, 0
    %p146 = por %p144, %p145
    %p147 = scmp.ne.s32.totalorder %s136, %s139
    %p148 = scmp.eq.s32.totalorder %s19, 7
    %p149 = por %p147, %p148
    %p150 = scmp.ne.s32.totalorder %s139, %s140
    %p151 = scmp.eq.s32.totalorder %s19, 0
    %p152 = por %p150, %p151
    %p153 = scmp.ne.s32.totalorder %s139, %s140
    %p154 = scmp.eq.s32.totalorder %s20, 7
    %p155 = por %p153, %p154
    %p157 = scmp.ne.s32.totalorder %s140, %s156
    %p158 = scmp.eq.s32.totalorder %s20, 0
    %p159 = por %p157, %p158
    %p160 = scmp.le.s32.totalorder 1, %s14
    %p161 = scmp.lt.s32.totalorder %s14, 9
    %p162 = pnand %p160, %p161
    %p163 = pneg %p162
    // Predicated region
    $region9: #{attention_block_pallas.5} parent=5 // pred_check
      _
    $region10: #{attention_block_pallas.5} parent=5 // pred_check_branch
      %165 = sbr.rel (%p162) target = $region12
    $region11: #{attention_block_pallas.5} parent=5 // pred_region
      %s166 = ssub.s32 %s14, 1
      // Predicated region
      $region13: #{attention_block_pallas.5} parent=11 // pred_check
        %p167 = pneg %p103
      $region14: #{attention_block_pallas.5} parent=11 // pred_check_branch
        %169 = sbr.rel (%p167) target = $region16
      $region15: #{attention_block_pallas.5} parent=11 // pred_region
        _
      $region16: #{attention_block_pallas.5} parent=11 // pred_fallthru
        _
      // Predicated region
      $region17: #{attention_block_pallas.5} parent=11 // pred_check
        %p170 = pneg %p124
      $region18: #{attention_block_pallas.5} parent=11 // pred_check_branch
        %172 = sbr.rel (%p170) target = $region20
      $region19: #{attention_block_pallas.5} parent=11 // pred_region
        _
      $region20: #{attention_block_pallas.5} parent=11 // pred_fallthru
        _
    $region12: #{attention_block_pallas.5} parent=5 // pred_fallthru
      _
    %p173 = scmp.lt.s32.totalorder %s14, 8
    // Predicated region
    $region21: #{attention_block_pallas.5} parent=5 // pred_check
      %p174 = pneg %p173
    $region22: #{attention_block_pallas.5} parent=5 // pred_check_branch
      %176 = sbr.rel (%p174) target = $region24
    $region23: #{attention_block_pallas.5} parent=5 // pred_region
      // Predicated region
      $region25: #{attention_block_pallas.5} parent=23 // pred_check
        %p177 = pneg %p48
      $region26: #{attention_block_pallas.5} parent=23 // pred_check_branch
        %179 = sbr.rel (%p177) target = $region28
      $region27: #{attention_block_pallas.5} parent=23 // pred_region
        %s180 = smul.u32 2, %s22
        %p181 = scmp.lt.s32.totalorder %s21, 1
        %s182 = scalar_select %p181, %s21, 1
        %p183 = scmp.lt.s32.totalorder %s180, 7
        %s184 = scalar_select %p183, %s180, 7
        %s185 = smul.addr %s182, 8
        %s186 = sadd.s32 %s184, %s185
        %s187 = smul.addr %s186, 4
        %s188 = scalar_lea.vmem %s0, %s187
        %s189 = smul.u32 2, %s22
      $region28: #{attention_block_pallas.5} parent=23 // pred_fallthru
        _
      // Predicated region
      $region29: #{attention_block_pallas.5} parent=23 // pred_check
        %p190 = pneg %p76
      $region30: #{attention_block_pallas.5} parent=23 // pred_check_branch
        %192 = sbr.rel (%p190) target = $region32
      $region31: #{attention_block_pallas.5} parent=23 // pred_region
        %s193 = smul.u32 2, %s22
        %p194 = scmp.lt.s32.totalorder %s21, 1
        %s195 = scalar_select %p194, %s21, 1
        %p196 = scmp.lt.s32.totalorder %s193, 7
        %s197 = scalar_select %p196, %s193, 7
        %s198 = smul.addr %s195, 8
        %s199 = sadd.s32 %s197, %s198
        %s200 = scalar_lea.vmem %s1, %s199
        %s201 = smul.u32 2, %s22
      $region32: #{attention_block_pallas.5} parent=23 // pred_fallthru
        _
    $region24: #{attention_block_pallas.5} parent=5 // pred_fallthru
      _
    %p202 = scmp.le.s32.totalorder 1, %s14
    %p203 = scmp.lt.s32.totalorder %s14, 9
    %p204 = pnand %p202, %p203
    %p205 = pneg %p204
    // Predicated region
    $region33: #{attention_block_pallas.5} parent=5 // pred_check
      _
    $region34: #{attention_block_pallas.5} parent=5 // pred_check_branch
      %207 = sbr.rel (%p204) target = $region36
    $region35: #{attention_block_pallas.5} parent=5 // pred_region
      %s208 = ssub.s32 %s14, 1
      %s209 = smul.u32 2, %s24
      %p210 = scmp.lt.s32.totalorder %s23, 1
      %s211 = scalar_select %p210, %s23, 1
      %p212 = scmp.lt.s32.totalorder %s209, 7
      %s213 = scalar_select %p212, %s209, 7
      %s214 = smul.addr %s211, 8
      %s215 = sadd.s32 %s213, %s214
      %s216 = smul.addr %s215, 4
      %s217 = scalar_lea.vmem %s0, %s216
      %p218 = pneg %p54
      %p219 = pneg %p51
      %s220 = smul.u32 2, %s24
      %p221 = scmp.lt.s32.totalorder %s23, 1
      %s222 = scalar_select %p221, %s23, 1
      %p223 = scmp.lt.s32.totalorder %s220, 7
      %s224 = scalar_select %p223, %s220, 7
      %s225 = smul.addr %s222, 8
      %s226 = sadd.s32 %s224, %s225
      %s227 = scalar_lea.vmem %s1, %s226
      %p228 = pneg %p82
      %p229 = pneg %p79
      %p230 = pneg %p103
      %p231 = pneg %p100
      %p232 = pneg %p124
      %p233 = pneg %p121
      %p234 = pneg %p152
      %p235 = pneg %p149
      %s236 = smul.u32 2, %s24
      %p237 = scmp.lt.s32.totalorder %s23, 1
      %s238 = scalar_select %p237, %s23, 1
      %p239 = scmp.lt.s32.totalorder %s236, 7
      %s240 = scalar_select %p239, %s236, 7
      %s241 = smul.addr %s238, 8
      %s242 = sadd.s32 %s240, %s241
      %s243 = smul.addr %s242, 4
      %s244 = scalar_lea.vmem %s4, %s243
      %s245 = smul.u32 2, %s24
      %p246 = scmp.lt.s32.totalorder %s23, 1
      %s247 = scalar_select %p246, %s23, 1
      %p248 = scmp.lt.s32.totalorder %s245, 7
      %s249 = scalar_select %p248, %s245, 7
      %s250 = smul.addr %s247, 8
      %s251 = sadd.s32 %s249, %s250
      %s252 = smul.addr %s251, 4
      %s253 = scalar_lea.vmem %s0, %s252
      %s254 = smul.u32 2, %s24
      %s255 = smul.u32 2, %s24
      %p256 = scmp.lt.s32.totalorder %s23, 1
      %s257 = scalar_select %p256, %s23, 1
      %p258 = scmp.lt.s32.totalorder %s255, 7
      %s259 = scalar_select %p258, %s255, 7
      %s260 = smul.addr %s257, 8
      %s261 = sadd.s32 %s259, %s260
      %s262 = scalar_lea.vmem %s1, %s261
      %s263 = smul.u32 2, %s24
      %s264 = smul.u32 2, %s24
      %p265 = scmp.lt.s32.totalorder %s23, 1
      %s266 = scalar_select %p265, %s23, 1
      %p267 = scmp.lt.s32.totalorder %s264, 7
      %s268 = scalar_select %p267, %s264, 7
      %s269 = smul.addr %s266, 8
      %s270 = sadd.s32 %s268, %s269
      %s271 = smul.addr %s270, 4
      %s272 = scalar_lea.vmem %s4, %s271
      %s273 = smul.u32 2, %s24
      %v274 = vld [vmem:[%s262] sm:$0x3]
      %v275 = vld [vmem:[#allocation2] sm:$0x1]
      %277 = vset.pattern.permute.xlu0 0
      %278 = vperm.xlu0 %277, %v275
      %v279 = vpop.permute.xlu0 %278
      %v281 = vlaneseq
      %v282 = vshrl.u32 %v281, 7
      %v283 = vsub.s32 0, %v282
      %v284 = vrot.slane %v279, %v283
      %v285 = vmul.f32 %v274, %v284
      %v286 = vld [vmem:[#allocation3] sm:$0x1]
      %288 = vset.pattern.permute.xlu0 0
      %289 = vperm.xlu0 %288, %v286
      %v290 = vpop.permute.xlu0 %289
      %v292 = vlaneseq
      %v293 = vshrl.u32 %v292, 7
      %v294 = vsub.s32 0, %v293
      %v295 = vrot.slane %v290, %v294
      %v296 = vadd.f32 %v285, %v295
      %v297 = vxor.u32 %v296, 2147483648
      %v298 = vmul.f32 %v297, 1.442695
      %v299 = vpow.pop %v298
      %v300 = vadd.f32 %v299, 1.0
      %v301 = vrcp.pop %v300
      %v302 = vmul.f32 1.0, %v301
      %v303 = vld [vmem:[%s253] sm:$0xff]
      %v305 = vlaneseq
      %v306 = vshrl.u32 %v305, 7
      %v307 = vsub.s32 0, %v306
      %v308 = vrot.slane %v302, %v307
      %v309 = vlaneseq
      %v310 = vshrl.u32 %v309, 7
      %v311 = vsub.s32 1, %v310
      %v312 = vrot.slane %v302, %v311
      %v313 = vcombine.low %v308, %v312
      %v315 = vmul.f32 %v303, %v313
      %316 = vst [vmem:[%s272] sm:$0xff] %v315
      %s317 = smul.u32 2, %s24
      %p318 = scmp.lt.s32.totalorder %s23, 1
      %s319 = scalar_select %p318, %s23, 1
      %p320 = scmp.lt.s32.totalorder %s317, 7
      %s321 = scalar_select %p320, %s317, 7
      %s322 = smul.addr %s319, 8
      %s323 = sadd.s32 %s321, %s322
      %s324 = smul.addr %s323, 4
      %s325 = scalar_lea.vmem %s4, %s324
      // Predicated region
      $region37: #{attention_block_pallas.5} parent=35 // pred_check
        %p326 = pneg %p149
      $region38: #{attention_block_pallas.5} parent=35 // pred_check_branch
        %328 = sbr.rel (%p326) target = $region40
      $region39: #{attention_block_pallas.5} parent=35 // pred_region
        %s329 = smul.u32 2, %s24
      $region40: #{attention_block_pallas.5} parent=35 // pred_fallthru
        _
    $region36: #{attention_block_pallas.5} parent=5 // pred_fallthru
      _
    %p330 = scmp.le.s32.totalorder 2, %s14
    // Predicated region
    $region41: #{attention_block_pallas.5} parent=5 // pred_check
      %p331 = pneg %p330
    $region42: #{attention_block_pallas.5} parent=5 // pred_check_branch
      %333 = sbr.rel (%p331) target = $region44
    $region43: #{attention_block_pallas.5} parent=5 // pred_region
      %s334 = ssub.s32 %s14, 2
      // Predicated region
      $region45: #{attention_block_pallas.5} parent=43 // pred_check
        %p335 = pneg %p155
      $region46: #{attention_block_pallas.5} parent=43 // pred_check_branch
        %337 = sbr.rel (%p335) target = $region48
      $region47: #{attention_block_pallas.5} parent=43 // pred_region
        %s338 = smul.u32 2, %s26
        %p339 = scmp.lt.s32.totalorder %s25, 1
        %s340 = scalar_select %p339, %s25, 1
        %p341 = scmp.lt.s32.totalorder %s338, 7
        %s342 = scalar_select %p341, %s338, 7
        %s343 = smul.addr %s340, 8
        %s344 = sadd.s32 %s342, %s343
        %s345 = smul.addr %s344, 4
        %s346 = scalar_lea.vmem %s4, %s345
      $region48: #{attention_block_pallas.5} parent=43 // pred_fallthru
        _
    $region44: #{attention_block_pallas.5} parent=5 // pred_fallthru
      _
  $region6: #{attention_block_pallas.5} parent=0 // loop_footer
    %s18 = sadd.s32 1, %s14
  $region7: #{attention_block_pallas.5} parent=0 // loop_footer_branch
    %13 = sbr.rel target = $region3
  $region8: #{attention_block_pallas.5} parent=0 // loop_exit
    _

// kernel: attention_block_pallas.3
$region0: #{attention_block_pallas.3}
  #allocation0 [shape = 'u32[]', space=smem, size = 0x4, offset = 0x4, fixed_abs, tag = 'smem constant byte address 0x4 - core index']
  #allocation1 [shape = 'u32[144,128]{1,0:T(1,128)}', space=vmem, size = 0x12000, scoped, tag = 'internal scratch']
  %s0 = inlined_call_operand.vmem [shape: f32[2,4,1024], index: 0, kind: input, shape index: {}]
  %s1 = inlined_call_operand.vmem [shape: f32[2,4,1024], index: 1, kind: input, shape index: {}]
  %s2 = inlined_call_operand.vmem [shape: f32[4,4], index: 2, kind: output, shape index: {0}]
  %s3 = inlined_call_operand.vmem [shape: f32[4,1], index: 3, kind: output, shape index: {1}]
  %s4 = inlined_call_operand.vmem [shape: f32[4,4], index: 4, kind: output, shape index: {2}]
  %s5 = inlined_call_operand.vmem [shape: f32[4,1], index: 5, kind: output, shape index: {3}]
  %6 = xla_tuple %s2, %s3, %s4, %s5
  %s7 = sld [smem:[#allocation0]]
  $region69: #{attention_block_pallas.3} parent=0
    _
  %s9 = ssub.s32 1, %s7
  %s10 = scalar_select 0, %s9, %s7
  loop: start=0, step=1, limit=10
  $region2: #{attention_block_pallas.3} parent=0 // loop_pre_header
    _
  $region3: #{attention_block_pallas.3} parent=0 // loop_header
    %s12 = sphi 0, %s16
    %p13 = scmp.ge.s32.totalorder %s12, 10
    %s19 = sphi 0, %s31
    %s20 = sphi 0, %s27
    %s21 = sphi 0, %s19
    %s22 = sphi 0, %s20
    %s23 = sphi 0, %s21
    %s24 = sphi 0, %s22
    %s36 = sphi 0, %s38
    %s39 = sphi 0, %s36
    %s40 = sphi 0, %s39
    %s56 = sphi 0, %s40
    %s64 = sphi 0, %s66
    %s67 = sphi 0, %s64
    %s68 = sphi 0, %s67
    %s84 = sphi 0, %s68
    %s88 = sphi 0, %s88
    %s90 = sphi 0, %s88
    %s91 = sphi 0, %s90
    %s105 = sphi 0, %s91
    %s109 = sphi 0, %s109
    %s111 = sphi 0, %s109
    %s112 = sphi 0, %s111
    %s126 = sphi 0, %s112
    %s130 = sphi 0, %s130
    %s132 = sphi 0, %s130
    %s133 = sphi 0, %s132
    %s147 = sphi 0, %s133
    %s151 = sphi 0, %s151
    %s153 = sphi 0, %s151
    %s154 = sphi 0, %s153
    %s168 = sphi 0, %s154
  $region4: #{attention_block_pallas.3} parent=0 // loop_header_branch
    %15 = sbr.rel (%p13) target = $region8
  $region5: #{attention_block_pallas.3} parent=0 // loop_body
    %s17 = ssub.s32 %s12, 1
    %s18 = ssub.s32 %s12, 2
    %s25 = sadd.s32 1, %s20
    %p26 = scmp.ge.s32.totalorder %s25, 4
    %s27 = scalar_select %p26, 0, %s25
    %s28 = sadd.s32 1, %s19
    %s29 = scalar_select %p26, %s28, %s19
    %p30 = scmp.ge.s32.totalorder %s29, 2
    %s31 = scalar_select %p30, 0, %s29
    %s32 = ssub.s32 %s19, %s31
    %s33 = ssub.s32 %s20, %s27
    %s34 = sor.u32 %s32, %s33
    %p35 = scmp.eq.s32.totalorder %s34, 0
    %s37 = sadd.s32 %s36, 1
    %s38 = scalar_select %p35, %s36, %s37
    %p41 = pneg %p35
    %p42 = scmp.eq.s32.totalorder %s12, 7
    %p43 = por %p41, %p42
    %p44 = scmp.ne.s32.totalorder %s36, %s39
    %p45 = scmp.eq.s32.totalorder %s12, 0
    %p46 = por %p44, %p45
    %p47 = scmp.ne.s32.totalorder %s36, %s39
    %p48 = scmp.eq.s32.totalorder %s17, 7
    %p49 = por %p47, %p48
    %p50 = scmp.ne.s32.totalorder %s39, %s40
    %p51 = scmp.eq.s32.totalorder %s17, 0
    %p52 = por %p50, %p51
    %p53 = scmp.ne.s32.totalorder %s39, %s40
    %p54 = scmp.eq.s32.totalorder %s18, 7
    %p55 = por %p53, %p54
    %p57 = scmp.ne.s32.totalorder %s40, %s56
    %p58 = scmp.eq.s32.totalorder %s18, 0
    %p59 = por %p57, %p58
    %s60 = ssub.s32 %s19, %s31
    %s61 = ssub.s32 %s20, %s27
    %s62 = sor.u32 %s60, %s61
    %p63 = scmp.eq.s32.totalorder %s62, 0
    %s65 = sadd.s32 %s64, 1
    %s66 = scalar_select %p63, %s64, %s65
    %p69 = pneg %p63
    %p70 = scmp.eq.s32.totalorder %s12, 7
    %p71 = por %p69, %p70
    %p72 = scmp.ne.s32.totalorder %s64, %s67
    %p73 = scmp.eq.s32.totalorder %s12, 0
    %p74 = por %p72, %p73
    %p75 = scmp.ne.s32.totalorder %s64, %s67
    %p76 = scmp.eq.s32.totalorder %s17, 7
    %p77 = por %p75, %p76
    %p78 = scmp.ne.s32.totalorder %s67, %s68
    %p79 = scmp.eq.s32.totalorder %s17, 0
    %p80 = por %p78, %p79
    %p81 = scmp.ne.s32.totalorder %s67, %s68
    %p82 = scmp.eq.s32.totalorder %s18, 7
    %p83 = por %p81, %p82
    %p85 = scmp.ne.s32.totalorder %s68, %s84
    %p86 = scmp.eq.s32.totalorder %s18, 0
    %p87 = por %p85, %p86
    %s89 = sadd.s32 %s88, 1
    %p92 = scmp.eq.s32.totalorder %s12, 7
    %p93 = scmp.ne.s32.totalorder %s88, %s90
    %p94 = scmp.eq.s32.totalorder %s12, 0
    %p95 = por %p93, %p94
    %p96 = scmp.ne.s32.totalorder %s88, %s90
    %p97 = scmp.eq.s32.totalorder %s17, 7
    %p98 = por %p96, %p97
    %p99 = scmp.ne.s32.totalorder %s90, %s91
    %p100 = scmp.eq.s32.totalorder %s17, 0
    %p101 = por %p99, %p100
    %p102 = scmp.ne.s32.totalorder %s90, %s91
    %p103 = scmp.eq.s32.totalorder %s18, 7
    %p104 = por %p102, %p103
    %p106 = scmp.ne.s32.totalorder %s91, %s105
    %p107 = scmp.eq.s32.totalorder %s18, 0
    %p108 = por %p106, %p107
    %s110 = sadd.s32 %s109, 1
    %p113 = scmp.eq.s32.totalorder %s12, 7
    %p114 = scmp.ne.s32.totalorder %s109, %s111
    %p115 = scmp.eq.s32.totalorder %s12, 0
    %p116 = por %p114, %p115
    %p117 = scmp.ne.s32.totalorder %s109, %s111
    %p118 = scmp.eq.s32.totalorder %s17, 7
    %p119 = por %p117, %p118
    %p120 = scmp.ne.s32.totalorder %s111, %s112
    %p121 = scmp.eq.s32.totalorder %s17, 0
    %p122 = por %p120, %p121
    %p123 = scmp.ne.s32.totalorder %s111, %s112
    %p124 = scmp.eq.s32.totalorder %s18, 7
    %p125 = por %p123, %p124
    %p127 = scmp.ne.s32.totalorder %s112, %s126
    %p128 = scmp.eq.s32.totalorder %s18, 0
    %p129 = por %p127, %p128
    %s131 = sadd.s32 %s130, 1
    %p134 = scmp.eq.s32.totalorder %s12, 7
    %p135 = scmp.ne.s32.totalorder %s130, %s132
    %p136 = scmp.eq.s32.totalorder %s12, 0
    %p137 = por %p135, %p136
    %p138 = scmp.ne.s32.totalorder %s130, %s132
    %p139 = scmp.eq.s32.totalorder %s17, 7
    %p140 = por %p138, %p139
    %p141 = scmp.ne.s32.totalorder %s132, %s133
    %p142 = scmp.eq.s32.totalorder %s17, 0
    %p143 = por %p141, %p142
    %p144 = scmp.ne.s32.totalorder %s132, %s133
    %p145 = scmp.eq.s32.totalorder %s18, 7
    %p146 = por %p144, %p145
    %p148 = scmp.ne.s32.totalorder %s133, %s147
    %p149 = scmp.eq.s32.totalorder %s18, 0
    %p150 = por %p148, %p149
    %s152 = sadd.s32 %s151, 1
    %p155 = scmp.eq.s32.totalorder %s12, 7
    %p156 = scmp.ne.s32.totalorder %s151, %s153
    %p157 = scmp.eq.s32.totalorder %s12, 0
    %p158 = por %p156, %p157
    %p159 = scmp.ne.s32.totalorder %s151, %s153
    %p160 = scmp.eq.s32.totalorder %s17, 7
    %p161 = por %p159, %p160
    %p162 = scmp.ne.s32.totalorder %s153, %s154
    %p163 = scmp.eq.s32.totalorder %s17, 0
    %p164 = por %p162, %p163
    %p165 = scmp.ne.s32.totalorder %s153, %s154
    %p166 = scmp.eq.s32.totalorder %s18, 7
    %p167 = por %p165, %p166
    %p169 = scmp.ne.s32.totalorder %s154, %s168
    %p170 = scmp.eq.s32.totalorder %s18, 0
    %p171 = por %p169, %p170
    %p172 = scmp.le.s32.totalorder 1, %s12
    %p173 = scmp.lt.s32.totalorder %s12, 9
    %p174 = pnand %p172, %p173
    %p175 = pneg %p174
    // Predicated region
    $region9: #{attention_block_pallas.3} parent=5 // pred_check
      _
    $region10: #{attention_block_pallas.3} parent=5 // pred_check_branch
      %177 = sbr.rel (%p174) target = $region12
    $region11: #{attention_block_pallas.3} parent=5 // pred_region
      %s178 = ssub.s32 %s12, 1
    $region12: #{attention_block_pallas.3} parent=5 // pred_fallthru
      _
    %p179 = scmp.lt.s32.totalorder %s12, 8
    // Predicated region
    $region13: #{attention_block_pallas.3} parent=5 // pred_check
      %p180 = pneg %p179
    $region14: #{attention_block_pallas.3} parent=5 // pred_check_branch
      %182 = sbr.rel (%p180) target = $region16
    $region15: #{attention_block_pallas.3} parent=5 // pred_region
      // Predicated region
      $region17: #{attention_block_pallas.3} parent=15 // pred_check
        %p183 = pneg %p46
      $region18: #{attention_block_pallas.3} parent=15 // pred_check_branch
        %185 = sbr.rel (%p183) target = $region20
      $region19: #{attention_block_pallas.3} parent=15 // pred_region
        %s186 = smul.u32 2, %s20
        %p187 = scmp.lt.s32.totalorder %s19, 1
        %s188 = scalar_select %p187, %s19, 1
        %p189 = scmp.lt.s32.totalorder %s186, 7
        %s190 = scalar_select %p189, %s186, 7
        %s191 = smul.addr %s188, 8
        %s192 = sadd.s32 %s190, %s191
        %s193 = smul.addr %s192, 4
        %s194 = scalar_lea.vmem %s0, %s193
        %s195 = smul.u32 2, %s20
      $region20: #{attention_block_pallas.3} parent=15 // pred_fallthru
        _
      // Predicated region
      $region21: #{attention_block_pallas.3} parent=15 // pred_check
        %p196 = pneg %p74
      $region22: #{attention_block_pallas.3} parent=15 // pred_check_branch
        %198 = sbr.rel (%p196) target = $region24
      $region23: #{attention_block_pallas.3} parent=15 // pred_region
        %s199 = smul.u32 2, %s20
        %p200 = scmp.lt.s32.totalorder %s19, 1
        %s201 = scalar_select %p200, %s19, 1
        %p202 = scmp.lt.s32.totalorder %s199, 7
        %s203 = scalar_select %p202, %s199, 7
        %s204 = smul.addr %s201, 8
        %s205 = sadd.s32 %s203, %s204
        %s206 = smul.addr %s205, 4
        %s207 = scalar_lea.vmem %s1, %s206
        %s208 = smul.u32 2, %s20
      $region24: #{attention_block_pallas.3} parent=15 // pred_fallthru
        _
    $region16: #{attention_block_pallas.3} parent=5 // pred_fallthru
      _
    %p209 = scmp.le.s32.totalorder 1, %s12
    %p210 = scmp.lt.s32.totalorder %s12, 9
    %p211 = pnand %p209, %p210
    %p212 = pneg %p211
    // Predicated region
    $region25: #{attention_block_pallas.3} parent=5 // pred_check
      _
    $region26: #{attention_block_pallas.3} parent=5 // pred_check_branch
      %214 = sbr.rel (%p211) target = $region28
    $region27: #{attention_block_pallas.3} parent=5 // pred_region
      %s215 = ssub.s32 %s12, 1
      %s216 = smul.u32 2, %s22
      %p217 = scmp.lt.s32.totalorder %s21, 1
      %s218 = scalar_select %p217, %s21, 1
      %p219 = scmp.lt.s32.totalorder %s216, 7
      %s220 = scalar_select %p219, %s216, 7
      %s221 = smul.addr %s218, 8
      %s222 = sadd.s32 %s220, %s221
      %s223 = smul.addr %s222, 4
      %s224 = scalar_lea.vmem %s0, %s223
      %p225 = pneg %p52
      %p226 = pneg %p49
      %s227 = smul.u32 2, %s22
      %p228 = scmp.lt.s32.totalorder %s21, 1
      %s229 = scalar_select %p228, %s21, 1
      %p230 = scmp.lt.s32.totalorder %s227, 7
      %s231 = scalar_select %p230, %s227, 7
      %s232 = smul.addr %s229, 8
      %s233 = sadd.s32 %s231, %s232
      %s234 = smul.addr %s233, 4
      %s235 = scalar_lea.vmem %s1, %s234
      %p236 = pneg %p80
      %p237 = pneg %p77
      %p238 = pneg %p101
      %p239 = pneg %p98
      %p240 = pneg %p122
      %p241 = pneg %p119
      %p242 = pneg %p143
      %p243 = pneg %p140
      %p244 = pneg %p164
      %p245 = pneg %p161
      %s246 = smul.u32 2, %s22
      %p247 = scmp.lt.s32.totalorder %s21, 1
      %s248 = scalar_select %p247, %s21, 1
      %p249 = scmp.lt.s32.totalorder %s246, 7
      %s250 = scalar_select %p249, %s246, 7
      %s251 = smul.addr %s248, 8
      %s252 = sadd.s32 %s250, %s251
      %s253 = smul.addr %s252, 4
      %s254 = scalar_lea.vmem %s0, %s253
      %s255 = smul.u32 2, %s22
      %s256 = smul.u32 2, %s22
      %p257 = scmp.lt.s32.totalorder %s21, 1
      %s258 = scalar_select %p257, %s21, 1
      %p259 = scmp.lt.s32.totalorder %s256, 7
      %s260 = scalar_select %p259, %s256, 7
      %s261 = smul.addr %s258, 8
      %s262 = sadd.s32 %s260, %s261
      %s263 = smul.addr %s262, 4
      %s264 = scalar_lea.vmem %s1, %s263
      %s265 = smul.u32 2, %s22
      %p266 = scmp.eq.s32.totalorder %s21, 0
      %p267 = scmp.eq.s32.totalorder %s22, 0
      %p268 = pnand %p266, %p267
      %p269 = pneg %p268
      // Predicated region
      $region29: #{attention_block_pallas.3} parent=27 // pred_check
        _
      $region30: #{attention_block_pallas.3} parent=27 // pred_check_branch
        %271 = sbr.rel (%p268) target = $region32
      $region31: #{attention_block_pallas.3} parent=27 // pred_region
        %vm272 = vcmask 27648
        %273 = vst.msk [vmem:[%s2] sm:$0xf] %vm272, 0.0
        %vm274 = vcmask 3072
        %275 = vst.msk [vmem:[%s3] sm:$0xf] %vm274, 0.0
        %276 = vst.msk [vmem:[%s4] sm:$0xf] %vm272, 0.0
        %277 = vst.msk [vmem:[%s5] sm:$0xf] %vm274, 0.0
      $region32: #{attention_block_pallas.3} parent=27 // pred_fallthru
        _
      %v278 = vld [vmem:[%s254] sm:$0xff]
      %v279 = vld [vmem:[%s264] sm:$0xff]
      %v280 = vld [vmem:[%s2] sm:$0xf]
      %v282 = vcombine.high %v278, %v278
      %284 = vmatprep.subr.mxu0 %v282
      %285 = vmatpush1.xpose.msra.mxu0 %v278
      %286 = vmatprep.subr.mxu0 0.0
      %287 = vmatpush1.xpose.msra.mxu0 0.0
      %288 = vmatprep.subr.mxu0 0.0
      %289 = vmatpush1.xpose.msra.mxu0 0.0
      %290 = vmatprep.subr.mxu0 0.0
      %291 = vmatpush1.xpose.msra.mxu0 0.0
      %292 = vmatprep.subr.mxu0 0.0
      %293 = vmatpush1.xpose.msra.mxu0 0.0
      %294 = vmatprep.subr.mxu0 0.0
      %295 = vmatpush1.xpose.msra.mxu0 0.0
      %296 = vmatprep.subr.mxu0 0.0
      %297 = vmatpush1.xpose.msra.mxu0 0.0
      %298 = vmatprep.subr.mxu0 0.0
      %299 = vmatpush1.xpose.msra.mxu0 0.0
      %300 = vmatprep.subr.mxu0 0.0
      %301 = vmatpush1.xpose.msra.mxu0 0.0
      %302 = vmatprep.subr.mxu0 0.0
      %303 = vmatpush1.xpose.msra.mxu0 0.0
      %304 = vmatprep.subr.mxu0 0.0
      %305 = vmatpush1.xpose.msra.mxu0 0.0
      %306 = vmatprep.subr.mxu0 0.0
      %307 = vmatpush1.xpose.msra.mxu0 0.0
      %308 = vmatprep.subr.mxu0 0.0
      %309 = vmatpush1.xpose.msra.mxu0 0.0
      %310 = vmatprep.subr.mxu0 0.0
      %311 = vmatpush1.xpose.msra.mxu0 0.0
      %312 = vmatprep.subr.mxu0 0.0
      %313 = vmatpush1.xpose.msra.mxu0 0.0
      %314 = vmatprep.subr.mxu0 0.0
      %315 = vmatpush1.xpose.msra.mxu0 0.0
      %316 = vmatprep.subr.mxu0 0.0
      %317 = vmatpush1.xpose.msra.mxu0 0.0
      %318 = vmatprep.subr.mxu0 0.0
      %319 = vmatpush1.xpose.msra.mxu0 0.0
      %320 = vmatprep.subr.mxu0 0.0
      %321 = vmatpush1.xpose.msra.mxu0 0.0
      %322 = vmatprep.subr.mxu0 0.0
      %323 = vmatpush1.xpose.msra.mxu0 0.0
      %324 = vmatprep.subr.mxu0 0.0
      %325 = vmatpush1.xpose.msra.mxu0 0.0
      %326 = vmatprep.subr.mxu0 0.0
      %327 = vmatpush1.xpose.msra.mxu0 0.0
      %328 = vmatprep.subr.mxu0 0.0
      %329 = vmatpush1.xpose.msra.mxu0 0.0
      %330 = vmatprep.subr.mxu0 0.0
      %331 = vmatpush1.xpose.msra.mxu0 0.0
      %332 = vmatprep.subr.mxu0 0.0
      %333 = vmatpush1.xpose.msra.mxu0 0.0
      %334 = vmatprep.subr.mxu0 0.0
      %335 = vmatpush1.xpose.msra.mxu0 0.0
      %336 = vmatprep.subr.mxu0 0.0
      %337 = vmatpush1.xpose.msra.mxu0 0.0
      %338 = vmatprep.subr.mxu0 0.0
      %339 = vmatpush1.xpose.msra.mxu0 0.0
      %340 = vmatprep.subr.mxu0 0.0
      %341 = vmatpush1.xpose.msra.mxu0 0.0
      %342 = vmatprep.subr.mxu0 0.0
      %343 = vmatpush1.xpose.msra.mxu0 0.0
      %344 = vmatprep.subr.mxu0 0.0
      %345 = vmatpush1.xpose.msra.mxu0 0.0
      %346 = vmatprep.subr.mxu0 0.0
      %347 = vmatpush1.xpose.msra.mxu0 0.0
      %348 = vmatprep.mubr.f32.mxu0 %v282
      %349 = vmatmul.mubr.f32.gmra.mrb[0].mxu0 %v278
      %v350 = vpop.f32.mrb[0].mxu0
      %v351 = vadd.f32 0.0, %v350
      %v352 = vpop.f32.mrb[0].mxu0
      %353 = vdwg.mxu0
      %v354 = vadd.f32 %v280, %v351
      %vm355 = vcmask 27648
      %356 = vst.msk [vmem:[%s2] sm:$0xf] %vm355, %v354
      %v357 = vld [vmem:[%s4] sm:$0xf]
      %v359 = vcombine.high %v279, %v279
      %361 = vmatprep.subr.mxu0 %v359
      %362 = vmatpush1.xpose.msra.mxu0 %v279
      %363 = vmatprep.subr.mxu0 0.0
      %364 = vmatpush1.xpose.msra.mxu0 0.0
      %365 = vmatprep.subr.mxu0 0.0
      %366 = vmatpush1.xpose.msra.mxu0 0.0
      %367 = vmatprep.subr.mxu0 0.0
      %368 = vmatpush1.xpose.msra.mxu0 0.0
      %369 = vmatprep.subr.mxu0 0.0
      %370 = vmatpush1.xpose.msra.mxu0 0.0
      %371 = vmatprep.subr.mxu0 0.0
      %372 = vmatpush1.xpose.msra.mxu0 0.0
      %373 = vmatprep.subr.mxu0 0.0
      %374 = vmatpush1.xpose.msra.mxu0 0.0
      %375 = vmatprep.subr.mxu0 0.0
      %376 = vmatpush1.xpose.msra.mxu0 0.0
      %377 = vmatprep.subr.mxu0 0.0
      %378 = vmatpush1.xpose.msra.mxu0 0.0
      %379 = vmatprep.subr.mxu0 0.0
      %380 = vmatpush1.xpose.msra.mxu0 0.0
      %381 = vmatprep.subr.mxu0 0.0
      %382 = vmatpush1.xpose.msra.mxu0 0.0
      %383 = vmatprep.subr.mxu0 0.0
      %384 = vmatpush1.xpose.msra.mxu0 0.0
      %385 = vmatprep.subr.mxu0 0.0
      %386 = vmatpush1.xpose.msra.mxu0 0.0
      %387 = vmatprep.subr.mxu0 0.0
      %388 = vmatpush1.xpose.msra.mxu0 0.0
      %389 = vmatprep.subr.mxu0 0.0
      %390 = vmatpush1.xpose.msra.mxu0 0.0
      %391 = vmatprep.subr.mxu0 0.0
      %392 = vmatpush1.xpose.msra.mxu0 0.0
      %393 = vmatprep.subr.mxu0 0.0
      %394 = vmatpush1.xpose.msra.mxu0 0.0
      %395 = vmatprep.subr.mxu0 0.0
      %396 = vmatpush1.xpose.msra.mxu0 0.0
      %397 = vmatprep.subr.mxu0 0.0
      %398 = vmatpush1.xpose.msra.mxu0 0.0
      %399 = vmatprep.subr.mxu0 0.0
      %400 = vmatpush1.xpose.msra.mxu0 0.0
      %401 = vmatprep.subr.mxu0 0.0
      %402 = vmatpush1.xpose.msra.mxu0 0.0
      %403 = vmatprep.subr.mxu0 0.0
      %404 = vmatpush1.xpose.msra.mxu0 0.0
      %405 = vmatprep.subr.mxu0 0.0
      %406 = vmatpush1.xpose.msra.mxu0 0.0
      %407 = vmatprep.subr.mxu0 0.0
      %408 = vmatpush1.xpose.msra.mxu0 0.0
      %409 = vmatprep.subr.mxu0 0.0
      %410 = vmatpush1.xpose.msra.mxu0 0.0
      %411 = vmatprep.subr.mxu0 0.0
      %412 = vmatpush1.xpose.msra.mxu0 0.0
      %413 = vmatprep.subr.mxu0 0.0
      %414 = vmatpush1.xpose.msra.mxu0 0.0
      %415 = vmatprep.subr.mxu0 0.0
      %416 = vmatpush1.xpose.msra.mxu0 0.0
      %417 = vmatprep.subr.mxu0 0.0
      %418 = vmatpush1.xpose.msra.mxu0 0.0
      %419 = vmatprep.subr.mxu0 0.0
      %420 = vmatpush1.xpose.msra.mxu0 0.0
      %421 = vmatprep.subr.mxu0 0.0
      %422 = vmatpush1.xpose.msra.mxu0 0.0
      %423 = vmatprep.subr.mxu0 0.0
      %424 = vmatpush1.xpose.msra.mxu0 0.0
      %425 = vmatprep.mubr.f32.mxu0 %v359
      %426 = vmatmul.mubr.f32.gmra.mrb[0].mxu0 %v279
      %v427 = vpop.f32.mrb[0].mxu0
      %v428 = vadd.f32 0.0, %v427
      %v429 = vpop.f32.mrb[0].mxu0
      %430 = vdwg.mxu0
      %v431 = vadd.f32 %v357, %v428
      %432 = vst.msk [vmem:[%s4] sm:$0xf] %vm355, %v431
      %v433 = vld [vmem:[%s3] sm:$0xf]
      %vm434 = vcmask 1043456
      %v435 = vsel %vm434, %v278, 0.0
      %v436 = vsel %vm434, %v282, 0.0
      %v437 = vadd.f32 %v435, %v436
      %438 = vadd.xlane.f32.xlu0 %v437
      %v439 = vpop.xlane.xlu0 %438
      %v440 = vadd.f32 %v433, %v439
      %vm441 = vcmask 3072
      %442 = vst.msk [vmem:[%s3] sm:$0xf] %vm441, %v440
      %v443 = vld [vmem:[%s5] sm:$0xf]
      %v444 = vsel %vm434, %v279, 0.0
      %v445 = vsel %vm434, %v359, 0.0
      %v446 = vadd.f32 %v444, %v445
      %447 = vadd.xlane.f32.xlu0 %v446
      %v448 = vpop.xlane.xlu0 %447
      %v449 = vadd.f32 %v443, %v448
      %450 = vst.msk [vmem:[%s5] sm:$0xf] %vm441, %v449
      // Predicated region
      $region33: #{attention_block_pallas.3} parent=27 // pred_check
        %p451 = pneg %p98
      $region34: #{attention_block_pallas.3} parent=27 // pred_check_branch
        %453 = sbr.rel (%p451) target = $region36
      $region35: #{attention_block_pallas.3} parent=27 // pred_region
        _
      $region36: #{attention_block_pallas.3} parent=27 // pred_fallthru
        _
      // Predicated region
      $region37: #{attention_block_pallas.3} parent=27 // pred_check
        %p454 = pneg %p119
      $region38: #{attention_block_pallas.3} parent=27 // pred_check_branch
        %456 = sbr.rel (%p454) target = $region40
      $region39: #{attention_block_pallas.3} parent=27 // pred_region
        _
      $region40: #{attention_block_pallas.3} parent=27 // pred_fallthru
        _
      // Predicated region
      $region41: #{attention_block_pallas.3} parent=27 // pred_check
        %p457 = pneg %p140
      $region42: #{attention_block_pallas.3} parent=27 // pred_check_branch
        %459 = sbr.rel (%p457) target = $region44
      $region43: #{attention_block_pallas.3} parent=27 // pred_region
        _
      $region44: #{attention_block_pallas.3} parent=27 // pred_fallthru
        _
      // Predicated region
      $region45: #{attention_block_pallas.3} parent=27 // pred_check
        %p460 = pneg %p161
      $region46: #{attention_block_pallas.3} parent=27 // pred_check_branch
        %462 = sbr.rel (%p460) target = $region48
      $region47: #{attention_block_pallas.3} parent=27 // pred_region
        _
      $region48: #{attention_block_pallas.3} parent=27 // pred_fallthru
        _
      // Predicated region
      $region49: #{attention_block_pallas.3} parent=27 // pred_check
        %p463 = pneg %p98
      $region50: #{attention_block_pallas.3} parent=27 // pred_check_branch
        %465 = sbr.rel (%p463) target = $region52
      $region51: #{attention_block_pallas.3} parent=27 // pred_region
        _
      $region52: #{attention_block_pallas.3} parent=27 // pred_fallthru
        _
      // Predicated region
      $region53: #{attention_block_pallas.3} parent=27 // pred_check
        %p466 = pneg %p119
      $region54: #{attention_block_pallas.3} parent=27 // pred_check_branch
        %468 = sbr.rel (%p466) target = $region56
      $region55: #{attention_block_pallas.3} parent=27 // pred_region
        _
      $region56: #{attention_block_pallas.3} parent=27 // pred_fallthru
        _
      // Predicated region
      $region57: #{attention_block_pallas.3} parent=27 // pred_check
        %p469 = pneg %p140
      $region58: #{attention_block_pallas.3} parent=27 // pred_check_branch
        %471 = sbr.rel (%p469) target = $region60
      $region59: #{attention_block_pallas.3} parent=27 // pred_region
        _
      $region60: #{attention_block_pallas.3} parent=27 // pred_fallthru
        _
      // Predicated region
      $region61: #{attention_block_pallas.3} parent=27 // pred_check
        %p472 = pneg %p161
      $region62: #{attention_block_pallas.3} parent=27 // pred_check_branch
        %474 = sbr.rel (%p472) target = $region64
      $region63: #{attention_block_pallas.3} parent=27 // pred_region
        _
      $region64: #{attention_block_pallas.3} parent=27 // pred_fallthru
        _
    $region28: #{attention_block_pallas.3} parent=5 // pred_fallthru
      _
    %p475 = scmp.le.s32.totalorder 2, %s12
    // Predicated region
    $region65: #{attention_block_pallas.3} parent=5 // pred_check
      %p476 = pneg %p475
    $region66: #{attention_block_pallas.3} parent=5 // pred_check_branch
      %478 = sbr.rel (%p476) target = $region68
    $region67: #{attention_block_pallas.3} parent=5 // pred_region
      %s479 = ssub.s32 %s12, 2
    $region68: #{attention_block_pallas.3} parent=5 // pred_fallthru
      _
  $region6: #{attention_block_pallas.3} parent=0 // loop_footer
    %s16 = sadd.s32 1, %s12
  $region7: #{attention_block_pallas.3} parent=0 // loop_footer_branch
    %11 = sbr.rel target = $region3
  $region8: #{attention_block_pallas.3} parent=0 // loop_exit
    _

// kernel: attention_block_pallas.4
$region0: #{attention_block_pallas.4}
  #allocation0 [shape = 'u32[]', space=smem, size = 0x4, offset = 0x4, fixed_abs, tag = 'smem constant byte address 0x4 - core index']
  #allocation1 [shape = 'u32[144,128]{1,0:T(1,128)}', space=vmem, size = 0x12000, scoped, tag = 'internal scratch']
  %s0 = inlined_call_operand.vmem [shape: f32[2,4,1024], index: 0, kind: input, shape index: {}]
  %s1 = inlined_call_operand.vmem [shape: f32[2,4,1024], index: 1, kind: input, shape index: {}]
  %s2 = inlined_call_operand.vmem [shape: f32[8,4], index: 2, kind: input, shape index: {}]
  %s3 = inlined_call_operand.vmem [shape: f32[8,4], index: 3, kind: input, shape index: {}]
  %s4 = inlined_call_operand.vmem [shape: f32[8,1], index: 4, kind: input, shape index: {}]
  %s5 = inlined_call_operand.vmem [shape: f32[8,1], index: 5, kind: input, shape index: {}]
  %s6 = inlined_call_operand.vmem [shape: f32[8,1], index: 6, kind: input, shape index: {}]
  %s7 = inlined_call_operand.vmem [shape: f32[8,1], index: 7, kind: input, shape index: {}]
  %s8 = inlined_call_operand.vmem [shape: f32[8,1], index: 8, kind: input, shape index: {}]
  %s9 = inlined_call_operand.vmem [shape: f32[2,1,1024], index: 9, kind: output, shape index: {0}]
  %s10 = inlined_call_operand.hbm [shape: f32[1,1], index: 10, kind: output, shape index: {1}]
  %s11 = inlined_call_operand.hbm [shape: f32[1,1], index: 11, kind: output, shape index: {2}]
  %12 = xla_tuple %s9, %s10, %s11
  %s13 = sld [smem:[#allocation0]]
  $region89: #{attention_block_pallas.4} parent=0
    _
  %s15 = ssub.s32 1, %s13
  %s16 = scalar_select 0, %s15, %s13
  $region1: #{attention_block_pallas.4} parent=0
    #allocation2 [shape = 'u8[512]{0}', space=vmem, size = 0x400, scoped, tag = 'output window, operand 1, single buffered']
    #allocation3 [shape = 's32[2]{0}', space=sflag, size = 0x8, scoped, tag = 'scoped memory for attention_block_pallas.4']
    #allocation4 [shape = 'u8[512]{0}', space=vmem, size = 0x400, scoped, tag = 'output window, operand 2, single buffered']
    #allocation5 [shape = 's32[1]{0}', space=sflag, size = 0x4, scoped, tag = 'scoped memory for attention_block_pallas.4']
    %17 = vsyncpa [#allocation3], 0
    %18 = vsyncpa [#allocation5], 0
    loop: start=0, step=1, limit=10
    $region2: #{attention_block_pallas.4} parent=1 // loop_pre_header
      _
    $region3: #{attention_block_pallas.4} parent=1 // loop_header
      %s20 = sphi 0, %s24
      %p21 = scmp.ge.s32.totalorder %s20, 10
      %s27 = sphi 0, %s39
      %s28 = sphi 0, %s35
      %s29 = sphi 0, %s27
      %s30 = sphi 0, %s28
      %s31 = sphi 0, %s29
      %s32 = sphi 0, %s30
      %s44 = sphi 0, %s46
      %s47 = sphi 0, %s44
      %s48 = sphi 0, %s47
      %s64 = sphi 0, %s48
      %s72 = sphi 0, %s74
      %s75 = sphi 0, %s72
      %s76 = sphi 0, %s75
      %s92 = sphi 0, %s76
      %s96 = sphi 0, %s96
      %s98 = sphi 0, %s96
      %s99 = sphi 0, %s98
      %s113 = sphi 0, %s99
      %s117 = sphi 0, %s117
      %s119 = sphi 0, %s117
      %s120 = sphi 0, %s119
      %s134 = sphi 0, %s120
      %s138 = sphi 0, %s138
      %s140 = sphi 0, %s138
      %s141 = sphi 0, %s140
      %s155 = sphi 0, %s141
      %s159 = sphi 0, %s159
      %s161 = sphi 0, %s159
      %s162 = sphi 0, %s161
      %s176 = sphi 0, %s162
      %s180 = sphi 0, %s180
      %s182 = sphi 0, %s180
      %s183 = sphi 0, %s182
      %s197 = sphi 0, %s183
      %s201 = sphi 0, %s201
      %s203 = sphi 0, %s201
      %s204 = sphi 0, %s203
      %s218 = sphi 0, %s204
      %s222 = sphi 0, %s222
      %s224 = sphi 0, %s222
      %s225 = sphi 0, %s224
      %s239 = sphi 0, %s225
      %s247 = sphi 0, %s249
      %s250 = sphi 0, %s247
      %s251 = sphi 0, %s250
      %s267 = sphi 0, %s251
      %s271 = sphi 0, %s271
      %s273 = sphi 0, %s271
      %s274 = sphi 0, %s273
      %s288 = sphi 0, %s274
      %s292 = sphi 0, %s292
      %s294 = sphi 0, %s292
      %s295 = sphi 0, %s294
      %s309 = sphi 0, %s295
    $region4: #{attention_block_pallas.4} parent=1 // loop_header_branch
      %23 = sbr.rel (%p21) target = $region8
    $region5: #{attention_block_pallas.4} parent=1 // loop_body
      %s25 = ssub.s32 %s20, 1
      %s26 = ssub.s32 %s20, 2
      %s33 = sadd.s32 1, %s28
      %p34 = scmp.ge.s32.totalorder %s33, 4
      %s35 = scalar_select %p34, 0, %s33
      %s36 = sadd.s32 1, %s27
      %s37 = scalar_select %p34, %s36, %s27
      %p38 = scmp.ge.s32.totalorder %s37, 2
      %s39 = scalar_select %p38, 0, %s37
      %s40 = ssub.s32 %s27, %s39
      %s41 = ssub.s32 %s28, %s35
      %s42 = sor.u32 %s40, %s41
      %p43 = scmp.eq.s32.totalorder %s42, 0
      %s45 = sadd.s32 %s44, 1
      %s46 = scalar_select %p43, %s44, %s45
      %p49 = pneg %p43
      %p50 = scmp.eq.s32.totalorder %s20, 7
      %p51 = por %p49, %p50
      %p52 = scmp.ne.s32.totalorder %s44, %s47
      %p53 = scmp.eq.s32.totalorder %s20, 0
      %p54 = por %p52, %p53
      %p55 = scmp.ne.s32.totalorder %s44, %s47
      %p56 = scmp.eq.s32.totalorder %s25, 7
      %p57 = por %p55, %p56
      %p58 = scmp.ne.s32.totalorder %s47, %s48
      %p59 = scmp.eq.s32.totalorder %s25, 0
      %p60 = por %p58, %p59
      %p61 = scmp.ne.s32.totalorder %s47, %s48
      %p62 = scmp.eq.s32.totalorder %s26, 7
      %p63 = por %p61, %p62
      %p65 = scmp.ne.s32.totalorder %s48, %s64
      %p66 = scmp.eq.s32.totalorder %s26, 0
      %p67 = por %p65, %p66
      %s68 = ssub.s32 %s27, %s39
      %s69 = ssub.s32 %s28, %s35
      %s70 = sor.u32 %s68, %s69
      %p71 = scmp.eq.s32.totalorder %s70, 0
      %s73 = sadd.s32 %s72, 1
      %s74 = scalar_select %p71, %s72, %s73
      %p77 = pneg %p71
      %p78 = scmp.eq.s32.totalorder %s20, 7
      %p79 = por %p77, %p78
      %p80 = scmp.ne.s32.totalorder %s72, %s75
      %p81 = scmp.eq.s32.totalorder %s20, 0
      %p82 = por %p80, %p81
      %p83 = scmp.ne.s32.totalorder %s72, %s75
      %p84 = scmp.eq.s32.totalorder %s25, 7
      %p85 = por %p83, %p84
      %p86 = scmp.ne.s32.totalorder %s75, %s76
      %p87 = scmp.eq.s32.totalorder %s25, 0
      %p88 = por %p86, %p87
      %p89 = scmp.ne.s32.totalorder %s75, %s76
      %p90 = scmp.eq.s32.totalorder %s26, 7
      %p91 = por %p89, %p90
      %p93 = scmp.ne.s32.totalorder %s76, %s92
      %p94 = scmp.eq.s32.totalorder %s26, 0
      %p95 = por %p93, %p94
      %s97 = sadd.s32 %s96, 1
      %p100 = scmp.eq.s32.totalorder %s20, 7
      %p101 = scmp.ne.s32.totalorder %s96, %s98
      %p102 = scmp.eq.s32.totalorder %s20, 0
      %p103 = por %p101, %p102
      %p104 = scmp.ne.s32.totalorder %s96, %s98
      %p105 = scmp.eq.s32.totalorder %s25, 7
      %p106 = por %p104, %p105
      %p107 = scmp.ne.s32.totalorder %s98, %s99
      %p108 = scmp.eq.s32.totalorder %s25, 0
      %p109 = por %p107, %p108
      %p110 = scmp.ne.s32.totalorder %s98, %s99
      %p111 = scmp.eq.s32.totalorder %s26, 7
      %p112 = por %p110, %p111
      %p114 = scmp.ne.s32.totalorder %s99, %s113
      %p115 = scmp.eq.s32.totalorder %s26, 0
      %p116 = por %p114, %p115
      %s118 = sadd.s32 %s117, 1
      %p121 = scmp.eq.s32.totalorder %s20, 7
      %p122 = scmp.ne.s32.totalorder %s117, %s119
      %p123 = scmp.eq.s32.totalorder %s20, 0
      %p124 = por %p122, %p123
      %p125 = scmp.ne.s32.totalorder %s117, %s119
      %p126 = scmp.eq.s32.totalorder %s25, 7
      %p127 = por %p125, %p126
      %p128 = scmp.ne.s32.totalorder %s119, %s120
      %p129 = scmp.eq.s32.totalorder %s25, 0
      %p130 = por %p128, %p129
      %p131 = scmp.ne.s32.totalorder %s119, %s120
      %p132 = scmp.eq.s32.totalorder %s26, 7
      %p133 = por %p131, %p132
      %p135 = scmp.ne.s32.totalorder %s120, %s134
      %p136 = scmp.eq.s32.totalorder %s26, 0
      %p137 = por %p135, %p136
      %s139 = sadd.s32 %s138, 1
      %p142 = scmp.eq.s32.totalorder %s20, 7
      %p143 = scmp.ne.s32.totalorder %s138, %s140
      %p144 = scmp.eq.s32.totalorder %s20, 0
      %p145 = por %p143, %p144
      %p146 = scmp.ne.s32.totalorder %s138, %s140
      %p147 = scmp.eq.s32.totalorder %s25, 7
      %p148 = por %p146, %p147
      %p149 = scmp.ne.s32.totalorder %s140, %s141
      %p150 = scmp.eq.s32.totalorder %s25, 0
      %p151 = por %p149, %p150
      %p152 = scmp.ne.s32.totalorder %s140, %s141
      %p153 = scmp.eq.s32.totalorder %s26, 7
      %p154 = por %p152, %p153
      %p156 = scmp.ne.s32.totalorder %s141, %s155
      %p157 = scmp.eq.s32.totalorder %s26, 0
      %p158 = por %p156, %p157
      %s160 = sadd.s32 %s159, 1
      %p163 = scmp.eq.s32.totalorder %s20, 7
      %p164 = scmp.ne.s32.totalorder %s159, %s161
      %p165 = scmp.eq.s32.totalorder %s20, 0
      %p166 = por %p164, %p165
      %p167 = scmp.ne.s32.totalorder %s159, %s161
      %p168 = scmp.eq.s32.totalorder %s25, 7
      %p169 = por %p167, %p168
      %p170 = scmp.ne.s32.totalorder %s161, %s162
      %p171 = scmp.eq.s32.totalorder %s25, 0
      %p172 = por %p170, %p171
      %p173 = scmp.ne.s32.totalorder %s161, %s162
      %p174 = scmp.eq.s32.totalorder %s26, 7
      %p175 = por %p173, %p174
      %p177 = scmp.ne.s32.totalorder %s162, %s176
      %p178 = scmp.eq.s32.totalorder %s26, 0
      %p179 = por %p177, %p178
      %s181 = sadd.s32 %s180, 1
      %p184 = scmp.eq.s32.totalorder %s20, 7
      %p185 = scmp.ne.s32.totalorder %s180, %s182
      %p186 = scmp.eq.s32.totalorder %s20, 0
      %p187 = por %p185, %p186
      %p188 = scmp.ne.s32.totalorder %s180, %s182
      %p189 = scmp.eq.s32.totalorder %s25, 7
      %p190 = por %p188, %p189
      %p191 = scmp.ne.s32.totalorder %s182, %s183
      %p192 = scmp.eq.s32.totalorder %s25, 0
      %p193 = por %p191, %p192
      %p194 = scmp.ne.s32.totalorder %s182, %s183
      %p195 = scmp.eq.s32.totalorder %s26, 7
      %p196 = por %p194, %p195
      %p198 = scmp.ne.s32.totalorder %s183, %s197
      %p199 = scmp.eq.s32.totalorder %s26, 0
      %p200 = por %p198, %p199
      %s202 = sadd.s32 %s201, 1
      %p205 = scmp.eq.s32.totalorder %s20, 7
      %p206 = scmp.ne.s32.totalorder %s201, %s203
      %p207 = scmp.eq.s32.totalorder %s20, 0
      %p208 = por %p206, %p207
      %p209 = scmp.ne.s32.totalorder %s201, %s203
      %p210 = scmp.eq.s32.totalorder %s25, 7
      %p211 = por %p209, %p210
      %p212 = scmp.ne.s32.totalorder %s203, %s204
      %p213 = scmp.eq.s32.totalorder %s25, 0
      %p214 = por %p212, %p213
      %p215 = scmp.ne.s32.totalorder %s203, %s204
      %p216 = scmp.eq.s32.totalorder %s26, 7
      %p217 = por %p215, %p216
      %p219 = scmp.ne.s32.totalorder %s204, %s218
      %p220 = scmp.eq.s32.totalorder %s26, 0
      %p221 = por %p219, %p220
      %s223 = sadd.s32 %s222, 1
      %p226 = scmp.eq.s32.totalorder %s20, 7
      %p227 = scmp.ne.s32.totalorder %s222, %s224
      %p228 = scmp.eq.s32.totalorder %s20, 0
      %p229 = por %p227, %p228
      %p230 = scmp.ne.s32.totalorder %s222, %s224
      %p231 = scmp.eq.s32.totalorder %s25, 7
      %p232 = por %p230, %p231
      %p233 = scmp.ne.s32.totalorder %s224, %s225
      %p234 = scmp.eq.s32.totalorder %s25, 0
      %p235 = por %p233, %p234
      %p236 = scmp.ne.s32.totalorder %s224, %s225
      %p237 = scmp.eq.s32.totalorder %s26, 7
      %p238 = por %p236, %p237
      %p240 = scmp.ne.s32.totalorder %s225, %s239
      %p241 = scmp.eq.s32.totalorder %s26, 0
      %p242 = por %p240, %p241
      %s243 = ssub.s32 %s27, %s39
      %s244 = ssub.s32 %s28, %s35
      %s245 = sor.u32 %s243, %s244
      %p246 = scmp.eq.s32.totalorder %s245, 0
      %s248 = sadd.s32 %s247, 1
      %s249 = scalar_select %p246, %s247, %s248
      %p252 = pneg %p246
      %p253 = scmp.eq.s32.totalorder %s20, 7
      %p254 = por %p252, %p253
      %p255 = scmp.ne.s32.totalorder %s247, %s250
      %p256 = scmp.eq.s32.totalorder %s20, 0
      %p257 = por %p255, %p256
      %p258 = scmp.ne.s32.totalorder %s247, %s250
      %p259 = scmp.eq.s32.totalorder %s25, 7
      %p260 = por %p258, %p259
      %p261 = scmp.ne.s32.totalorder %s250, %s251
      %p262 = scmp.eq.s32.totalorder %s25, 0
      %p263 = por %p261, %p262
      %p264 = scmp.ne.s32.totalorder %s250, %s251
      %p265 = scmp.eq.s32.totalorder %s26, 7
      %p266 = por %p264, %p265
      %p268 = scmp.ne.s32.totalorder %s251, %s267
      %p269 = scmp.eq.s32.totalorder %s26, 0
      %p270 = por %p268, %p269
      %s272 = sadd.s32 %s271, 1
      %p275 = scmp.eq.s32.totalorder %s20, 7
      %p276 = scmp.ne.s32.totalorder %s271, %s273
      %p277 = scmp.eq.s32.totalorder %s20, 0
      %p278 = por %p276, %p277
      %p279 = scmp.ne.s32.totalorder %s271, %s273
      %p280 = scmp.eq.s32.totalorder %s25, 7
      %p281 = por %p279, %p280
      %p282 = scmp.ne.s32.totalorder %s273, %s274
      %p283 = scmp.eq.s32.totalorder %s25, 0
      %p284 = por %p282, %p283
      %p285 = scmp.ne.s32.totalorder %s273, %s274
      %p286 = scmp.eq.s32.totalorder %s26, 7
      %p287 = por %p285, %p286
      %p289 = scmp.ne.s32.totalorder %s274, %s288
      %p290 = scmp.eq.s32.totalorder %s26, 0
      %p291 = por %p289, %p290
      %s293 = sadd.s32 %s292, 1
      %p296 = scmp.eq.s32.totalorder %s20, 7
      %p297 = scmp.ne.s32.totalorder %s292, %s294
      %p298 = scmp.eq.s32.totalorder %s20, 0
      %p299 = por %p297, %p298
      %p300 = scmp.ne.s32.totalorder %s292, %s294
      %p301 = scmp.eq.s32.totalorder %s25, 7
      %p302 = por %p300, %p301
      %p303 = scmp.ne.s32.totalorder %s294, %s295
      %p304 = scmp.eq.s32.totalorder %s25, 0
      %p305 = por %p303, %p304
      %p306 = scmp.ne.s32.totalorder %s294, %s295
      %p307 = scmp.eq.s32.totalorder %s26, 7
      %p308 = por %p306, %p307
      %p310 = scmp.ne.s32.totalorder %s295, %s309
      %p311 = scmp.eq.s32.totalorder %s26, 0
      %p312 = por %p310, %p311
      %p313 = scmp.le.s32.totalorder 1, %s20
      %p314 = scmp.lt.s32.totalorder %s20, 9
      %p315 = pnand %p313, %p314
      %p316 = pneg %p315
      // Predicated region
      $region9: #{attention_block_pallas.4} parent=5 // pred_check
        _
      $region10: #{attention_block_pallas.4} parent=5 // pred_check_branch
        %318 = sbr.rel (%p315) target = $region12
      $region11: #{attention_block_pallas.4} parent=5 // pred_region
        %s319 = ssub.s32 %s20, 1
        // Predicated region
        $region13: #{attention_block_pallas.4} parent=11 // pred_check
          %p320 = pneg %p109
        $region14: #{attention_block_pallas.4} parent=11 // pred_check_branch
          %322 = sbr.rel (%p320) target = $region16
        $region15: #{attention_block_pallas.4} parent=11 // pred_region
          _
        $region16: #{attention_block_pallas.4} parent=11 // pred_fallthru
          _
        // Predicated region
        $region17: #{attention_block_pallas.4} parent=11 // pred_check
          %p323 = pneg %p130
        $region18: #{attention_block_pallas.4} parent=11 // pred_check_branch
          %325 = sbr.rel (%p323) target = $region20
        $region19: #{attention_block_pallas.4} parent=11 // pred_region
          _
        $region20: #{attention_block_pallas.4} parent=11 // pred_fallthru
          _
        // Predicated region
        $region21: #{attention_block_pallas.4} parent=11 // pred_check
          %p326 = pneg %p151
        $region22: #{attention_block_pallas.4} parent=11 // pred_check_branch
          %328 = sbr.rel (%p326) target = $region24
        $region23: #{attention_block_pallas.4} parent=11 // pred_region
          _
        $region24: #{attention_block_pallas.4} parent=11 // pred_fallthru
          _
        // Predicated region
        $region25: #{attention_block_pallas.4} parent=11 // pred_check
          %p329 = pneg %p172
        $region26: #{attention_block_pallas.4} parent=11 // pred_check_branch
          %331 = sbr.rel (%p329) target = $region28
        $region27: #{attention_block_pallas.4} parent=11 // pred_region
          _
        $region28: #{attention_block_pallas.4} parent=11 // pred_fallthru
          _
        // Predicated region
        $region29: #{attention_block_pallas.4} parent=11 // pred_check
          %p332 = pneg %p193
        $region30: #{attention_block_pallas.4} parent=11 // pred_check_branch
          %334 = sbr.rel (%p332) target = $region32
        $region31: #{attention_block_pallas.4} parent=11 // pred_region
          _
        $region32: #{attention_block_pallas.4} parent=11 // pred_fallthru
          _
        // Predicated region
        $region33: #{attention_block_pallas.4} parent=11 // pred_check
          %p335 = pneg %p214
        $region34: #{attention_block_pallas.4} parent=11 // pred_check_branch
          %337 = sbr.rel (%p335) target = $region36
        $region35: #{attention_block_pallas.4} parent=11 // pred_region
          _
        $region36: #{attention_block_pallas.4} parent=11 // pred_fallthru
          _
        // Predicated region
        $region37: #{attention_block_pallas.4} parent=11 // pred_check
          %p338 = pneg %p235
        $region38: #{attention_block_pallas.4} parent=11 // pred_check_branch
          %340 = sbr.rel (%p338) target = $region40
        $region39: #{attention_block_pallas.4} parent=11 // pred_region
          _
        $region40: #{attention_block_pallas.4} parent=11 // pred_fallthru
          _
      $region12: #{attention_block_pallas.4} parent=5 // pred_fallthru
        _
      %p341 = scmp.lt.s32.totalorder %s20, 8
      // Predicated region
      $region41: #{attention_block_pallas.4} parent=5 // pred_check
        %p342 = pneg %p341
      $region42: #{attention_block_pallas.4} parent=5 // pred_check_branch
        %344 = sbr.rel (%p342) target = $region44
      $region43: #{attention_block_pallas.4} parent=5 // pred_region
        // Predicated region
        $region45: #{attention_block_pallas.4} parent=43 // pred_check
          %p345 = pneg %p54
        $region46: #{attention_block_pallas.4} parent=43 // pred_check_branch
          %347 = sbr.rel (%p345) target = $region48
        $region47: #{attention_block_pallas.4} parent=43 // pred_region
          %s348 = smul.u32 2, %s28
          %p349 = scmp.lt.s32.totalorder %s27, 1
          %s350 = scalar_select %p349, %s27, 1
          %p351 = scmp.lt.s32.totalorder %s348, 7
          %s352 = scalar_select %p351, %s348, 7
          %s353 = smul.addr %s350, 8
          %s354 = sadd.s32 %s352, %s353
          %s355 = smul.addr %s354, 4
          %s356 = scalar_lea.vmem %s0, %s355
          %s357 = smul.u32 2, %s28
        $region48: #{attention_block_pallas.4} parent=43 // pred_fallthru
          _
        // Predicated region
        $region49: #{attention_block_pallas.4} parent=43 // pred_check
          %p358 = pneg %p82
        $region50: #{attention_block_pallas.4} parent=43 // pred_check_branch
          %360 = sbr.rel (%p358) target = $region52
        $region51: #{attention_block_pallas.4} parent=43 // pred_region
          %s361 = smul.u32 2, %s28
          %p362 = scmp.lt.s32.totalorder %s27, 1
          %s363 = scalar_select %p362, %s27, 1
          %p364 = scmp.lt.s32.totalorder %s361, 7
          %s365 = scalar_select %p364, %s361, 7
          %s366 = smul.addr %s363, 8
          %s367 = sadd.s32 %s365, %s366
          %s368 = smul.addr %s367, 4
          %s369 = scalar_lea.vmem %s1, %s368
          %s370 = smul.u32 2, %s28
        $region52: #{attention_block_pallas.4} parent=43 // pred_fallthru
          _
      $region44: #{attention_block_pallas.4} parent=5 // pred_fallthru
        _
      %p371 = scmp.le.s32.totalorder 1, %s20
      %p372 = scmp.lt.s32.totalorder %s20, 9
      %p373 = pnand %p371, %p372
      %p374 = pneg %p373
      // Predicated region
      $region53: #{attention_block_pallas.4} parent=5 // pred_check
        _
      $region54: #{attention_block_pallas.4} parent=5 // pred_check_branch
        %376 = sbr.rel (%p373) target = $region56
      $region55: #{attention_block_pallas.4} parent=5 // pred_region
        %s377 = ssub.s32 %s20, 1
        %s378 = smul.u32 2, %s30
        %p379 = scmp.lt.s32.totalorder %s29, 1
        %s380 = scalar_select %p379, %s29, 1
        %p381 = scmp.lt.s32.totalorder %s378, 7
        %s382 = scalar_select %p381, %s378, 7
        %s383 = smul.addr %s380, 8
        %s384 = sadd.s32 %s382, %s383
        %s385 = smul.addr %s384, 4
        %s386 = scalar_lea.vmem %s0, %s385
        %p387 = pneg %p60
        %p388 = pneg %p57
        %s389 = smul.u32 2, %s30
        %p390 = scmp.lt.s32.totalorder %s29, 1
        %s391 = scalar_select %p390, %s29, 1
        %p392 = scmp.lt.s32.totalorder %s389, 7
        %s393 = scalar_select %p392, %s389, 7
        %s394 = smul.addr %s391, 8
        %s395 = sadd.s32 %s393, %s394
        %s396 = smul.addr %s395, 4
        %s397 = scalar_lea.vmem %s1, %s396
        %p398 = pneg %p88
        %p399 = pneg %p85
        %p400 = pneg %p109
        %p401 = pneg %p106
        %p402 = pneg %p130
        %p403 = pneg %p127
        %p404 = pneg %p151
        %p405 = pneg %p148
        %p406 = pneg %p172
        %p407 = pneg %p169
        %p408 = pneg %p193
        %p409 = pneg %p190
        %p410 = pneg %p214
        %p411 = pneg %p211
        %p412 = pneg %p235
        %p413 = pneg %p232
        %p414 = pneg %p263
        %p415 = pneg %p260
        %s416 = smul.u32 2, %s30
        %p417 = scmp.lt.s32.totalorder %s29, 1
        %s418 = scalar_select %p417, %s29, 1
        %p419 = scmp.lt.s32.totalorder %s416, 7
        %s420 = scalar_select %p419, %s416, 7
        %s421 = smul.addr %s418, 8
        %s422 = sadd.s32 %s420, %s421
        %s423 = scalar_lea.vmem %s9, %s422
        %p424 = pneg %p284
        %p425 = pneg %p281
        %p426 = pneg %p305
        %p427 = pneg %p302
        %s428 = smul.u32 2, %s30
        %p429 = scmp.lt.s32.totalorder %s29, 1
        %s430 = scalar_select %p429, %s29, 1
        %p431 = scmp.lt.s32.totalorder %s428, 7
        %s432 = scalar_select %p431, %s428, 7
        %s433 = smul.addr %s430, 8
        %s434 = sadd.s32 %s432, %s433
        %s435 = smul.addr %s434, 4
        %s436 = scalar_lea.vmem %s0, %s435
        %s437 = smul.u32 2, %s30
        %s438 = smul.u32 2, %s30
        %p439 = scmp.lt.s32.totalorder %s29, 1
        %s440 = scalar_select %p439, %s29, 1
        %p441 = scmp.lt.s32.totalorder %s438, 7
        %s442 = scalar_select %p441, %s438, 7
        %s443 = smul.addr %s440, 8
        %s444 = sadd.s32 %s442, %s443
        %s445 = smul.addr %s444, 4
        %s446 = scalar_lea.vmem %s1, %s445
        %s447 = smul.u32 2, %s30
        %s448 = smul.u32 2, %s30
        %p449 = scmp.lt.s32.totalorder %s29, 1
        %s450 = scalar_select %p449, %s29, 1
        %p451 = scmp.lt.s32.totalorder %s448, 7
        %s452 = scalar_select %p451, %s448, 7
        %s453 = smul.addr %s450, 8
        %s454 = sadd.s32 %s452, %s453
        %s455 = scalar_lea.vmem %s9, %s454
        %s456 = smul.u32 2, %s30
        %p457 = scmp.eq.s32.totalorder %s29, 0
        %p458 = scmp.eq.s32.totalorder %s30, 0
        %p459 = pnand %p457, %p458
        %p460 = pneg %p459
        // Predicated region
        $region57: #{attention_block_pallas.4} parent=55 // pred_check
          _
        $region58: #{attention_block_pallas.4} parent=55 // pred_check_branch
          %462 = sbr.rel (%p459) target = $region60
        $region59: #{attention_block_pallas.4} parent=55 // pred_region
          %vm463 = vcmask 0
          %464 = vst.msk [vmem:[#allocation2] sm:$0x1] %vm463, 0.0
          %465 = vst.msk [vmem:[#allocation4] sm:$0x1] %vm463, 0.0
        $region60: #{attention_block_pallas.4} parent=55 // pred_fallthru
          _
        %v466 = vld [vmem:[%s436] sm:$0xff]
        %v467 = vld [vmem:[%s446] sm:$0xff]
        %v468 = vld [vmem:[%s2] sm:$0xff]
        %v470 = vcombine.high %v466, %v466
        %vm471 = vcmask 31744
        %v473 = vsel %vm471, %v468, 0
        %vm475 = vcmask 1043456
        %v476 = vsel %vm475, %v466, 0
        %v478 = vsel %vm475, %v470, 0
        %480 = vmatprep.subr.mxu0 %v478
        %481 = vmatpush1.msra.mxu0 %v476
        %482 = vmatprep.subr.mxu0 0.0
        %483 = vmatpush1.msra.mxu0 0.0
        %484 = vmatprep.subr.mxu0 0.0
        %485 = vmatpush1.msra.mxu0 0.0
        %486 = vmatprep.subr.mxu0 0.0
        %487 = vmatpush1.msra.mxu0 0.0
        %488 = vmatprep.subr.mxu0 0.0
        %489 = vmatpush1.msra.mxu0 0.0
        %490 = vmatprep.subr.mxu0 0.0
        %491 = vmatpush1.msra.mxu0 0.0
        %492 = vmatprep.subr.mxu0 0.0
        %493 = vmatpush1.msra.mxu0 0.0
        %494 = vmatprep.subr.mxu0 0.0
        %495 = vmatpush1.msra.mxu0 0.0
        %496 = vmatprep.subr.mxu0 0.0
        %497 = vmatpush1.msra.mxu0 0.0
        %498 = vmatprep.subr.mxu0 0.0
        %499 = vmatpush1.msra.mxu0 0.0
        %500 = vmatprep.subr.mxu0 0.0
        %501 = vmatpush1.msra.mxu0 0.0
        %502 = vmatprep.subr.mxu0 0.0
        %503 = vmatpush1.msra.mxu0 0.0
        %504 = vmatprep.subr.mxu0 0.0
        %505 = vmatpush1.msra.mxu0 0.0
        %506 = vmatprep.subr.mxu0 0.0
        %507 = vmatpush1.msra.mxu0 0.0
        %508 = vmatprep.subr.mxu0 0.0
        %509 = vmatpush1.msra.mxu0 0.0
        %510 = vmatprep.subr.mxu0 0.0
        %511 = vmatpush1.msra.mxu0 0.0
        %512 = vmatprep.subr.mxu0 0.0
        %513 = vmatpush1.msra.mxu0 0.0
        %514 = vmatprep.subr.mxu0 0.0
        %515 = vmatpush1.msra.mxu0 0.0
        %516 = vmatprep.subr.mxu0 0.0
        %517 = vmatpush1.msra.mxu0 0.0
        %518 = vmatprep.subr.mxu0 0.0
        %519 = vmatpush1.msra.mxu0 0.0
        %520 = vmatprep.subr.mxu0 0.0
        %521 = vmatpush1.msra.mxu0 0.0
        %522 = vmatprep.subr.mxu0 0.0
        %523 = vmatpush1.msra.mxu0 0.0
        %524 = vmatprep.subr.mxu0 0.0
        %525 = vmatpush1.msra.mxu0 0.0
        %526 = vmatprep.subr.mxu0 0.0
        %527 = vmatpush1.msra.mxu0 0.0
        %528 = vmatprep.subr.mxu0 0.0
        %529 = vmatpush1.msra.mxu0 0.0
        %530 = vmatprep.subr.mxu0 0.0
        %531 = vmatpush1.msra.mxu0 0.0
        %532 = vmatprep.subr.mxu0 0.0
        %533 = vmatpush1.msra.mxu0 0.0
        %534 = vmatprep.subr.mxu0 0.0
        %535 = vmatpush1.msra.mxu0 0.0
        %536 = vmatprep.subr.mxu0 0.0
        %537 = vmatpush1.msra.mxu0 0.0
        %538 = vmatprep.subr.mxu0 0.0
        %539 = vmatpush1.msra.mxu0 0.0
        %540 = vmatprep.subr.mxu0 0.0
        %541 = vmatpush1.msra.mxu0 0.0
        %542 = vmatprep.subr.mxu0 0.0
        %543 = vmatpush1.msra.mxu0 0.0
        %544 = vmatprep.mubr.f32.mxu0 0.0
        %545 = vmatmul.mubr.f32.gmra.mrb[0].mxu0 %v473
        %v546 = vpop.f32.mrb[0].mxu0
        %v547 = vadd.f32 0.0, %v546
        %v548 = vpop.f32.mrb[0].mxu0
        %v549 = vadd.f32 0.0, %v548
        %550 = vdwg.mxu0
        %v551 = vld [vmem:[%s3] sm:$0xff]
        %v553 = vcombine.high %v467, %v467
        %v555 = vsel %vm471, %v551, 0
        %v557 = vsel %vm475, %v467, 0
        %v559 = vsel %vm475, %v553, 0
        %561 = vmatprep.subr.mxu0 %v559
        %562 = vmatpush1.msra.mxu0 %v557
        %563 = vmatprep.subr.mxu0 0.0
        %564 = vmatpush1.msra.mxu0 0.0
        %565 = vmatprep.subr.mxu0 0.0
        %566 = vmatpush1.msra.mxu0 0.0
        %567 = vmatprep.subr.mxu0 0.0
        %568 = vmatpush1.msra.mxu0 0.0
        %569 = vmatprep.subr.mxu0 0.0
        %570 = vmatpush1.msra.mxu0 0.0
        %571 = vmatprep.subr.mxu0 0.0
        %572 = vmatpush1.msra.mxu0 0.0
        %573 = vmatprep.subr.mxu0 0.0
        %574 = vmatpush1.msra.mxu0 0.0
        %575 = vmatprep.subr.mxu0 0.0
        %576 = vmatpush1.msra.mxu0 0.0
        %577 = vmatprep.subr.mxu0 0.0
        %578 = vmatpush1.msra.mxu0 0.0
        %579 = vmatprep.subr.mxu0 0.0
        %580 = vmatpush1.msra.mxu0 0.0
        %581 = vmatprep.subr.mxu0 0.0
        %582 = vmatpush1.msra.mxu0 0.0
        %583 = vmatprep.subr.mxu0 0.0
        %584 = vmatpush1.msra.mxu0 0.0
        %585 = vmatprep.subr.mxu0 0.0
        %586 = vmatpush1.msra.mxu0 0.0
        %587 = vmatprep.subr.mxu0 0.0
        %588 = vmatpush1.msra.mxu0 0.0
        %589 = vmatprep.subr.mxu0 0.0
        %590 = vmatpush1.msra.mxu0 0.0
        %591 = vmatprep.subr.mxu0 0.0
        %592 = vmatpush1.msra.mxu0 0.0
        %593 = vmatprep.subr.mxu0 0.0
        %594 = vmatpush1.msra.mxu0 0.0
        %595 = vmatprep.subr.mxu0 0.0
        %596 = vmatpush1.msra.mxu0 0.0
        %597 = vmatprep.subr.mxu0 0.0
        %598 = vmatpush1.msra.mxu0 0.0
        %599 = vmatprep.subr.mxu0 0.0
        %600 = vmatpush1.msra.mxu0 0.0
        %601 = vmatprep.subr.mxu0 0.0
        %602 = vmatpush1.msra.mxu0 0.0
        %603 = vmatprep.subr.mxu0 0.0
        %604 = vmatpush1.msra.mxu0 0.0
        %605 = vmatprep.subr.mxu0 0.0
        %606 = vmatpush1.msra.mxu0 0.0
        %607 = vmatprep.subr.mxu0 0.0
        %608 = vmatpush1.msra.mxu0 0.0
        %609 = vmatprep.subr.mxu0 0.0
        %610 = vmatpush1.msra.mxu0 0.0
        %611 = vmatprep.subr.mxu0 0.0
        %612 = vmatpush1.msra.mxu0 0.0
        %613 = vmatprep.subr.mxu0 0.0
        %614 = vmatpush1.msra.mxu0 0.0
        %615 = vmatprep.subr.mxu0 0.0
        %616 = vmatpush1.msra.mxu0 0.0
        %617 = vmatprep.subr.mxu0 0.0
        %618 = vmatpush1.msra.mxu0 0.0
        %619 = vmatprep.subr.mxu0 0.0
        %620 = vmatpush1.msra.mxu0 0.0
        %621 = vmatprep.subr.mxu0 0.0
        %622 = vmatpush1.msra.mxu0 0.0
        %623 = vmatprep.subr.mxu0 0.0
        %624 = vmatpush1.msra.mxu0 0.0
        %625 = vmatprep.mubr.f32.mxu0 0.0
        %626 = vmatmul.mubr.f32.gmra.mrb[0].mxu0 %v555
        %v627 = vpop.f32.mrb[0].mxu0
        %v628 = vadd.f32 0.0, %v627
        %v629 = vpop.f32.mrb[0].mxu0
        %v630 = vadd.f32 0.0, %v629
        %631 = vdwg.mxu0
        %v632 = vld [vmem:[%s4] sm:$0xff]
        %634 = vset.pattern.permute.xlu0 0
        %635 = vperm.xlu0 %634, %v632
        %v636 = vpop.permute.xlu0 %635
        %v638 = vmul.f32 %v547, %v636
        %v639 = vmul.f32 %v549, %v636
        %v640 = vld [vmem:[%s5] sm:$0xff]
        %642 = vset.pattern.permute.xlu0 0
        %643 = vperm.xlu0 %642, %v640
        %v644 = vpop.permute.xlu0 %643
        %v646 = vadd.f32 %v638, %v644
        %v647 = vadd.f32 %v639, %v644
        %v648 = vld [vmem:[%s6] sm:$0xff]
        %650 = vset.pattern.permute.xlu0 0
        %651 = vperm.xlu0 %650, %v648
        %v652 = vpop.permute.xlu0 %651
        %v654 = vmul.f32 %v628, %v652
        %v655 = vmul.f32 %v630, %v652
        %v656 = vadd.f32 %v646, %v654
        %v657 = vadd.f32 %v647, %v655
        %v658 = vld [vmem:[%s7] sm:$0xff]
        %660 = vset.pattern.permute.xlu0 0
        %661 = vperm.xlu0 %660, %v658
        %v662 = vpop.permute.xlu0 %661
        %v664 = vadd.f32 %v656, %v662
        %v665 = vadd.f32 %v657, %v662
        %v666 = vmax.f32 %v664, 0.0
        %v667 = vmax.f32 %v665, 0.0
        %v668 = vld [vmem:[%s8] sm:$0xff]
        %670 = vset.pattern.permute.xlu0 0
        %671 = vperm.xlu0 %670, %v668
        %v672 = vpop.permute.xlu0 %671
        %v674 = vmul.f32 %v666, %v672
        %v675 = vmul.f32 %v667, %v672
        %v676 = vrot.slane %v674, 4
        %v677 = vadd.f32 %v674, %v676
        %v678 = vrot.slane %v677, 2
        %v679 = vadd.f32 %v677, %v678
        %v680 = vrot.slane %v679, 1
        %v681 = vadd.f32 %v679, %v680
        %v682 = vrot.slane %v675, 4
        %v683 = vadd.f32 %v675, %v682
        %v684 = vrot.slane %v683, 2
        %v685 = vadd.f32 %v683, %v684
        %v686 = vrot.slane %v685, 1
        %v687 = vadd.f32 %v685, %v686
        %v690 = vcombine.low %v681, %v687
        %v692 = vunpack.c.l.s4 1966171168
        %v693 = vunpack.c.0.s8 %v692
        %v694 = vlaneseq
        %v695 = vshrl.u32 %v694, 7
        %v696 = vsub.s32 %v693, %v695
        %v697 = vrot.slane %v690, %v696
        %v699 = vunpack.c.l.s4 1966171168
        %v700 = vunpack.c.0.s8 %v699
        %v701 = vlaneseq
        %v702 = vshrl.u32 %v701, 7
        %v703 = vsub.s32 %v700, %v702
        %v704 = vrot.slane %v697, %v703
        %v706 = vlaneseq
        %vm707 = vcmp.ge.s32.totalorder %v706, 0
        %vm708 = vcmp.lt.s32.totalorder %v706, 256
        %vm709 = vmand %vm707, %vm708
        %710 = vst.msk [vmem:[%s455] sm:$0x3] %vm709, %v704
        %v711 = vld [vmem:[#allocation2] sm:$0x1]
        %v712 = vadd.f32 %v681, %v687
        %713 = vadd.xlane.f32.xlu0 %v712
        %v714 = vpop.xlane.xlu0 %713
        %v715 = vadd.f32 %v711, %v714
        %vm716 = vcmask 0
        %717 = vst.msk [vmem:[#allocation2] sm:$0x1] %vm716, %v715
        %v718 = vld [vmem:[#allocation4] sm:$0x1]
        %v719 = vmul.f32 %v681, %v681
        %v720 = vmul.f32 %v687, %v687
        %v721 = vadd.f32 %v719, %v720
        %722 = vadd.xlane.f32.xlu0 %v721
        %v723 = vpop.xlane.xlu0 %722
        %v724 = vadd.f32 %v718, %v723
        %725 = vst.msk [vmem:[#allocation4] sm:$0x1] %vm716, %v724
        %s726 = smul.u32 2, %s30
        %p727 = scmp.lt.s32.totalorder %s29, 1
        %s728 = scalar_select %p727, %s29, 1
        %p729 = scmp.lt.s32.totalorder %s726, 7
        %s730 = scalar_select %p729, %s726, 7
        %s731 = smul.addr %s728, 8
        %s732 = sadd.s32 %s730, %s731
        %s733 = scalar_lea.vmem %s9, %s732
        // Predicated region
        $region61: #{attention_block_pallas.4} parent=55 // pred_check
          %p734 = pneg %p260
        $region62: #{attention_block_pallas.4} parent=55 // pred_check_branch
          %736 = sbr.rel (%p734) target = $region64
        $region63: #{attention_block_pallas.4} parent=55 // pred_region
          %s737 = smul.u32 2, %s30
        $region64: #{attention_block_pallas.4} parent=55 // pred_fallthru
          _
        // Predicated region
        $region65: #{attention_block_pallas.4} parent=55 // pred_check
          %p738 = pneg %p281
        $region66: #{attention_block_pallas.4} parent=55 // pred_check_branch
          %740 = sbr.rel (%p738) target = $region68
        $region67: #{attention_block_pallas.4} parent=55 // pred_region
          %s742 = ssub.s32 16, 16
          %743 = vsyncadd [#allocation3], %s742
          %s745 = sshll.u32 [#allocation2], 4
          %s746 = int_to_ptr.vmem [resolvable:$true] %s745
          %748 = dma.vmem_to_hbm [thread:$0]  %s746, 16, %s10, [#allocation3]
        $region68: #{attention_block_pallas.4} parent=55 // pred_fallthru
          _
        // Predicated region
        $region69: #{attention_block_pallas.4} parent=55 // pred_check
          %p749 = pneg %p302
        $region70: #{attention_block_pallas.4} parent=55 // pred_check_branch
          %751 = sbr.rel (%p749) target = $region72
        $region71: #{attention_block_pallas.4} parent=55 // pred_region
          %s753 = ssub.s32 16, 16
          %754 = vsyncadd [#allocation5], %s753
          %s756 = sshll.u32 [#allocation4], 4
          %s757 = int_to_ptr.vmem [resolvable:$true] %s756
          %759 = dma.vmem_to_hbm [thread:$0]  %s757, 16, %s11, [#allocation5]
        $region72: #{attention_block_pallas.4} parent=55 // pred_fallthru
          _
        // Predicated region
        $region73: #{attention_block_pallas.4} parent=55 // pred_check
          %p760 = pneg %p281
        $region74: #{attention_block_pallas.4} parent=55 // pred_check_branch
          %762 = sbr.rel (%p760) target = $region76
        $region75: #{attention_block_pallas.4} parent=55 // pred_region
          %763 = dma.done [#allocation3], 16
        $region76: #{attention_block_pallas.4} parent=55 // pred_fallthru
          _
        // Predicated region
        $region77: #{attention_block_pallas.4} parent=55 // pred_check
          %p764 = pneg %p302
        $region78: #{attention_block_pallas.4} parent=55 // pred_check_branch
          %766 = sbr.rel (%p764) target = $region80
        $region79: #{attention_block_pallas.4} parent=55 // pred_region
          %767 = dma.done [#allocation5], 16
        $region80: #{attention_block_pallas.4} parent=55 // pred_fallthru
          _
      $region56: #{attention_block_pallas.4} parent=5 // pred_fallthru
        _
      %p768 = scmp.le.s32.totalorder 2, %s20
      // Predicated region
      $region81: #{attention_block_pallas.4} parent=5 // pred_check
        %p769 = pneg %p768
      $region82: #{attention_block_pallas.4} parent=5 // pred_check_branch
        %771 = sbr.rel (%p769) target = $region84
      $region83: #{attention_block_pallas.4} parent=5 // pred_region
        %s772 = ssub.s32 %s20, 2
        // Predicated region
        $region85: #{attention_block_pallas.4} parent=83 // pred_check
          %p773 = pneg %p266
        $region86: #{attention_block_pallas.4} parent=83 // pred_check_branch
          %775 = sbr.rel (%p773) target = $region88
        $region87: #{attention_block_pallas.4} parent=83 // pred_region
          %s776 = smul.u32 2, %s32
          %p777 = scmp.lt.s32.totalorder %s31, 1
          %s778 = scalar_select %p777, %s31, 1
          %p779 = scmp.lt.s32.totalorder %s776, 7
          %s780 = scalar_select %p779, %s776, 7
          %s781 = smul.addr %s778, 8
          %s782 = sadd.s32 %s780, %s781
          %s783 = scalar_lea.vmem %s9, %s782
        $region88: #{attention_block_pallas.4} parent=83 // pred_fallthru
          _
      $region84: #{attention_block_pallas.4} parent=5 // pred_fallthru
        _
    $region6: #{attention_block_pallas.4} parent=1 // loop_footer
      %s24 = sadd.s32 1, %s20
    $region7: #{attention_block_pallas.4} parent=1 // loop_footer_branch
      %19 = sbr.rel target = $region3
    $region8: #{attention_block_pallas.4} parent=1 // loop_exit
      _
    %784 = vsyncpa [#allocation3], 1
    %s785 = scalar_lea.sflag [#allocation3], 1
    %786 = vsyncpa %s785, 1
    %787 = vsyncpa [#allocation5], 1

</llo_original>
